<compile_context>
chip_gen: v7x
topology: tpu7x:2x2x1
jax: 0.10.0
libtpu: 0.0.40
codegen_flags: <defaults>
</compile_context>

<pallas_src>
import math
import functools

import jax
import jax.numpy as jnp
from jax.experimental import pallas as pl
from jax.experimental.pallas import tpu as pltpu


LANE = 128  # TPU lane width: every feature dim is zero-padded to this.

_VMEM = pl.BlockSpec(memory_space=pltpu.MemorySpace.VMEM)


# ------------------------------ fused kernel -------------------------------

def _mlp_fused_kernel(x_ref, w_ref, b_ref, o_ref, *, num_blocks, input_dim):
    """Whole MLP forward in one kernel.

    x_ref: (B, input_dim) f32, unpadded.
    w_ref: (3*nb+2, 128, 128) bf16 weight slab, zero-padded.
           slot 0 = W_in, 1..nb = W1, nb+1..2nb = W2, 2nb+1..3nb = W3,
           3nb+1 = W_out.
    b_ref: (3*nb+2, 1, 128) f32 bias slab (same slot layout).
    o_ref: (B, 128) f32 lane-dense output (real cols = [:output_dim]).
    """
    nb = num_blocks

    # Input layer: only the real input rows of the padded W_in slot matter
    # (static ref slice -> zero runtime cost).
    w_in = w_ref[0, :input_dim, :].astype(jnp.float32)
    h = jnp.dot(x_ref[...], w_in, preferred_element_type=jnp.float32) + b_ref[0]

    # Residual bottleneck blocks.  Dropout is identity here (eval semantics).
    # TODO(synk): training-mode stochastic dropout is not implemented.
    for i in range(nb):                      # static Python unroll (nb tiny)
        t = jnp.dot(h, w_ref[1 + i].astype(jnp.float32),
                    preferred_element_type=jnp.float32) + b_ref[1 + i]
        t = jnp.maximum(t, 0.0)
        t = jnp.dot(t, w_ref[1 + nb + i].astype(jnp.float32),
                    preferred_element_type=jnp.float32) + b_ref[1 + nb + i]
        t = jnp.maximum(t, 0.0)
        t = jnp.dot(t, w_ref[1 + 2 * nb + i].astype(jnp.float32),
                    preferred_element_type=jnp.float32) + b_ref[1 + 2 * nb + i]
        h = h + t

    # Output layer (padded cols stay exactly 0).
    o_ref[...] = (jnp.dot(h, w_ref[1 + 3 * nb].astype(jnp.float32),
                          preferred_element_type=jnp.float32)
                  + b_ref[1 + 3 * nb])


# --------------------------- parameter handling ----------------------------

def _init_linear(key, fan_in, fan_out):
    """Deterministic PyTorch-style nn.Linear init; returns (W[in,out], b[out])."""
    k = 1.0 / math.sqrt(fan_in)
    kw, kb = jax.random.split(key)
    w = jax.random.uniform(kw, (fan_in, fan_out), jnp.float32, minval=-k, maxval=k)
    b = jax.random.uniform(kb, (fan_out,), jnp.float32, minval=-k, maxval=k)
    return w, b


def init_mlp_params(key, input_dim, hidden_dim, output_dim,
                    num_blocks=5, bottleneck_dim=64):
    keys = jax.random.split(key, 2 + 3 * num_blocks)
    params = {"input": _init_linear(keys[0], input_dim, hidden_dim),
              "blocks": []}
    for i in range(num_blocks):
        k0, k1, k2 = keys[1 + 3 * i: 1 + 3 * (i + 1)]
        params["blocks"].append((_init_linear(k0, hidden_dim, bottleneck_dim),
                                 _init_linear(k1, bottleneck_dim, bottleneck_dim),
                                 _init_linear(k2, bottleneck_dim, hidden_dim)))
    params["output"] = _init_linear(keys[-1], hidden_dim, output_dim)
    return params


def pack_params(params):
    """Pack all weights/biases into two padded slabs (one DMA each).

    Weights -> bf16 [3*nb+2, 128, 128]; biases -> f32 [3*nb+2, 1, 128].
    Requires every feature dim <= 128 (true for this module's defaults).
    """
    w_in, b_in = params["input"]
    w_out, b_out = params["output"]
    input_dim, hidden_dim = w_in.shape
    bottleneck_dim = params["blocks"][0][0][0].shape[1]
    output_dim = w_out.shape[1]
    nb = len(params["blocks"])
    assert max(input_dim, hidden_dim, bottleneck_dim, output_dim) <= LANE

    n_slots = 3 * nb + 2
    w_slab = jnp.zeros((n_slots, LANE, LANE), jnp.float32)
    b_slab = jnp.zeros((n_slots, 1, LANE), jnp.float32)

    def put_w(slab, idx, w):
        return slab.at[idx, :w.shape[0], :w.shape[1]].set(w)

    def put_b(slab, idx, b):
        return slab.at[idx, 0, :b.shape[0]].set(b)

    w_slab = put_w(w_slab, 0, w_in)
    b_slab = put_b(b_slab, 0, b_in)
    for i, ((w1, b1), (w2, b2), (w3, b3)) in enumerate(params["blocks"]):
        w_slab = put_w(w_slab, 1 + i, w1)
        b_slab = put_b(b_slab, 1 + i, b1)
        w_slab = put_w(w_slab, 1 + nb + i, w2)
        b_slab = put_b(b_slab, 1 + nb + i, b2)
        w_slab = put_w(w_slab, 1 + 2 * nb + i, w3)
        b_slab = put_b(b_slab, 1 + 2 * nb + i, b3)
    w_slab = put_w(w_slab, 1 + 3 * nb, w_out)
    b_slab = put_b(b_slab, 1 + 3 * nb, b_out)

    return {"w": w_slab.astype(jnp.bfloat16),   # halves HBM->VMEM traffic
            "b": b_slab,                        # biases tiny: keep f32
            "dims": (input_dim, hidden_dim, bottleneck_dim, output_dim),
            "num_blocks": nb}


# ------------------------------ forward pass -------------------------------

@functools.partial(jax.jit, static_argnames=("input_dim", "num_blocks"))
def mlp_forward(w_slab, b_slab, x, *, input_dim, num_blocks):
    """Returns lane-dense padded output (B, 128); real cols = [:output_dim]."""
    B = x.shape[0]
    n_slots = w_slab.shape[0]
    lane = w_slab.shape[-1]

    flops = 2 * B * lane * lane * n_slots
    bytes_accessed = (x.size * 4 + w_slab.size * 2 + b_slab.size * 4
                      + B * lane * 4)

    kernel = functools.partial(_mlp_fused_kernel,
                               num_blocks=num_blocks, input_dim=input_dim)
    out_pad = pl.pallas_call(
        kernel,
        out_shape=jax.ShapeDtypeStruct((B, lane), jnp.float32),
        in_specs=[_VMEM, _VMEM, _VMEM],
        out_specs=_VMEM,
        cost_estimate=pl.CostEstimate(flops=flops, transcendentals=0,
                                      bytes_accessed=bytes_accessed),
    )(x, w_slab, b_slab)
    return out_pad


def mlp_reference(params, x):
    """Pure-JAX reference of the PyTorch forward (eval mode), all f32."""
    w_in, b_in = params["input"]
    h = x @ w_in + b_in
    for (w1, b1), (w2, b2), (w3, b3) in params["blocks"]:
        t = jnp.maximum(h @ w1 + b1, 0.0)
        t = jnp.maximum(t @ w2 + b2, 0.0)
        t = t @ w3 + b3
        h = h + t
    w_out, b_out = params["output"]
    return h @ w_out + b_out


# --------------------------------- main ------------------------------------

if __name__ == "__main__":
    batch = 8
    input_dim = 16
    hidden_dim = 32
    output_dim = 8
    num_blocks = 5
    bottleneck_dim = 64

    key = jax.random.PRNGKey(0)
    k_params, k_x = jax.random.split(key)

    params = init_mlp_params(k_params, input_dim, hidden_dim, output_dim,
                             num_blocks=num_blocks, bottleneck_dim=bottleneck_dim)
    packed = pack_params(params)
    x = jax.random.normal(k_x, (batch, input_dim), dtype=jnp.float32)

    out_pad = mlp_forward(packed["w"], packed["b"], x,
                          input_dim=input_dim, num_blocks=num_blocks)
    out_pad = jax.block_until_ready(out_pad)
    out = out_pad[:, :output_dim]            # lazy consumer-side slice

    assert out.shape == (batch, output_dim), out.shape
    assert out.dtype == jnp.float32, out.dtype

    ref = jax.block_until_ready(mlp_reference(params, x))
    max_err = float(jnp.max(jnp.abs(out - ref)))
    # Tolerance is loose only because the weight slab is stored in bf16.
    assert jnp.allclose(out, ref, rtol=2e-2, atol=2e-2), max_err

    print("KERNEL_OK")
</pallas_src>

<mosaic_0001>
module attributes {stable_mosaic.version = 11 : i64} {
  func.func @_mlp_fused_kernel(%arg0: memref<8x16xf32, #tpu.memory_space<vmem>>, %arg1: memref<17x128x128xbf16, #tpu.memory_space<vmem>>, %arg2: memref<17x1x128xf32, #tpu.memory_space<vmem>>, %arg3: memref<8x128xf32, #tpu.memory_space<vmem>>) attributes {dimension_semantics = [], scalar_prefetch = 0 : i64, scratch_operands = 0 : i64, tpu.core_type = #tpu.core_type<tc>} {
    %c0 = arith.constant 0 : index
    %c0_0 = arith.constant 0 : index
    %c0_1 = arith.constant 0 : index
    %0 = vector.load %arg1[%c0, %c0_0, %c0_1] : memref<17x128x128xbf16, #tpu.memory_space<vmem>>, vector<1x16x128xbf16>
    %1 = vector.shape_cast %0 : vector<1x16x128xbf16> to vector<16x128xbf16>
    %2 = arith.extf %1 : vector<16x128xbf16> to vector<16x128xf32>
    %c0_2 = arith.constant 0 : index
    %c0_3 = arith.constant 0 : index
    %3 = vector.load %arg0[%c0_2, %c0_3] : memref<8x16xf32, #tpu.memory_space<vmem>>, vector<8x16xf32>
    %cst = arith.constant dense<0.000000e+00> : vector<8x128xf32>
    %4 = tpu.matmul %3, %2, %cst {dimension_numbers = #tpu.dot_dimension_numbers<[1], [0], [0], [1], [0, 0, 1, 1], [], []>} : vector<8x16xf32>, vector<16x128xf32>, vector<8x128xf32> -> vector<8x128xf32>
    %c0_4 = arith.constant 0 : index
    %c0_5 = arith.constant 0 : index
    %c0_6 = arith.constant 0 : index
    %5 = vector.load %arg2[%c0_4, %c0_5, %c0_6] : memref<17x1x128xf32, #tpu.memory_space<vmem>>, vector<1x1x128xf32>
    %6 = vector.shape_cast %5 : vector<1x1x128xf32> to vector<1x128xf32>
    %7 = vector.broadcast %6 : vector<1x128xf32> to vector<8x128xf32>
    %8 = arith.addf %4, %7 : vector<8x128xf32>
    %c1 = arith.constant 1 : index
    %c0_7 = arith.constant 0 : index
    %c0_8 = arith.constant 0 : index
    %9 = vector.load %arg1[%c1, %c0_7, %c0_8] : memref<17x128x128xbf16, #tpu.memory_space<vmem>>, vector<1x128x128xbf16>
    %10 = vector.shape_cast %9 : vector<1x128x128xbf16> to vector<128x128xbf16>
    %11 = arith.extf %10 : vector<128x128xbf16> to vector<128x128xf32>
    %cst_9 = arith.constant dense<0.000000e+00> : vector<8x128xf32>
    %12 = tpu.matmul %8, %11, %cst_9 {dimension_numbers = #tpu.dot_dimension_numbers<[1], [0], [0], [1], [0, 0, 1, 1], [], []>} : vector<8x128xf32>, vector<128x128xf32>, vector<8x128xf32> -> vector<8x128xf32>
    %c1_10 = arith.constant 1 : index
    %c0_11 = arith.constant 0 : index
    %c0_12 = arith.constant 0 : index
    %13 = vector.load %arg2[%c1_10, %c0_11, %c0_12] : memref<17x1x128xf32, #tpu.memory_space<vmem>>, vector<1x1x128xf32>
    %14 = vector.shape_cast %13 : vector<1x1x128xf32> to vector<1x128xf32>
    %15 = vector.broadcast %14 : vector<1x128xf32> to vector<8x128xf32>
    %16 = arith.addf %12, %15 : vector<8x128xf32>
    %cst_13 = arith.constant 0.000000e+00 : f32
    %17 = vector.broadcast %cst_13 : f32 to vector<8x128xf32>
    %18 = arith.maximumf %16, %17 : vector<8x128xf32>
    %c6 = arith.constant 6 : index
    %c0_14 = arith.constant 0 : index
    %c0_15 = arith.constant 0 : index
    %19 = vector.load %arg1[%c6, %c0_14, %c0_15] : memref<17x128x128xbf16, #tpu.memory_space<vmem>>, vector<1x128x128xbf16>
    %20 = vector.shape_cast %19 : vector<1x128x128xbf16> to vector<128x128xbf16>
    %21 = arith.extf %20 : vector<128x128xbf16> to vector<128x128xf32>
    %cst_16 = arith.constant dense<0.000000e+00> : vector<8x128xf32>
    %22 = tpu.matmul %18, %21, %cst_16 {dimension_numbers = #tpu.dot_dimension_numbers<[1], [0], [0], [1], [0, 0, 1, 1], [], []>} : vector<8x128xf32>, vector<128x128xf32>, vector<8x128xf32> -> vector<8x128xf32>
    %c6_17 = arith.constant 6 : index
    %c0_18 = arith.constant 0 : index
    %c0_19 = arith.constant 0 : index
    %23 = vector.load %arg2[%c6_17, %c0_18, %c0_19] : memref<17x1x128xf32, #tpu.memory_space<vmem>>, vector<1x1x128xf32>
    %24 = vector.shape_cast %23 : vector<1x1x128xf32> to vector<1x128xf32>
    %25 = vector.broadcast %24 : vector<1x128xf32> to vector<8x128xf32>
    %26 = arith.addf %22, %25 : vector<8x128xf32>
    %cst_20 = arith.constant 0.000000e+00 : f32
    %27 = vector.broadcast %cst_20 : f32 to vector<8x128xf32>
    %28 = arith.maximumf %26, %27 : vector<8x128xf32>
    %c11 = arith.constant 11 : index
    %c0_21 = arith.constant 0 : index
    %c0_22 = arith.constant 0 : index
    %29 = vector.load %arg1[%c11, %c0_21, %c0_22] : memref<17x128x128xbf16, #tpu.memory_space<vmem>>, vector<1x128x128xbf16>
    %30 = vector.shape_cast %29 : vector<1x128x128xbf16> to vector<128x128xbf16>
    %31 = arith.extf %30 : vector<128x128xbf16> to vector<128x128xf32>
    %cst_23 = arith.constant dense<0.000000e+00> : vector<8x128xf32>
    %32 = tpu.matmul %28, %31, %cst_23 {dimension_numbers = #tpu.dot_dimension_numbers<[1], [0], [0], [1], [0, 0, 1, 1], [], []>} : vector<8x128xf32>, vector<128x128xf32>, vector<8x128xf32> -> vector<8x128xf32>
    %c11_24 = arith.constant 11 : index
    %c0_25 = arith.constant 0 : index
    %c0_26 = arith.constant 0 : index
    %33 = vector.load %arg2[%c11_24, %c0_25, %c0_26] : memref<17x1x128xf32, #tpu.memory_space<vmem>>, vector<1x1x128xf32>
    %34 = vector.shape_cast %33 : vector<1x1x128xf32> to vector<1x128xf32>
    %35 = vector.broadcast %34 : vector<1x128xf32> to vector<8x128xf32>
    %36 = arith.addf %32, %35 : vector<8x128xf32>
    %37 = arith.addf %8, %36 : vector<8x128xf32>
    %c2 = arith.constant 2 : index
    %c0_27 = arith.constant 0 : index
    %c0_28 = arith.constant 0 : index
    %38 = vector.load %arg1[%c2, %c0_27, %c0_28] : memref<17x128x128xbf16, #tpu.memory_space<vmem>>, vector<1x128x128xbf16>
    %39 = vector.shape_cast %38 : vector<1x128x128xbf16> to vector<128x128xbf16>
    %40 = arith.extf %39 : vector<128x128xbf16> to vector<128x128xf32>
    %cst_29 = arith.constant dense<0.000000e+00> : vector<8x128xf32>
    %41 = tpu.matmul %37, %40, %cst_29 {dimension_numbers = #tpu.dot_dimension_numbers<[1], [0], [0], [1], [0, 0, 1, 1], [], []>} : vector<8x128xf32>, vector<128x128xf32>, vector<8x128xf32> -> vector<8x128xf32>
    %c2_30 = arith.constant 2 : index
    %c0_31 = arith.constant 0 : index
    %c0_32 = arith.constant 0 : index
    %42 = vector.load %arg2[%c2_30, %c0_31, %c0_32] : memref<17x1x128xf32, #tpu.memory_space<vmem>>, vector<1x1x128xf32>
    %43 = vector.shape_cast %42 : vector<1x1x128xf32> to vector<1x128xf32>
    %44 = vector.broadcast %43 : vector<1x128xf32> to vector<8x128xf32>
    %45 = arith.addf %41, %44 : vector<8x128xf32>
    %cst_33 = arith.constant 0.000000e+00 : f32
    %46 = vector.broadcast %cst_33 : f32 to vector<8x128xf32>
    %47 = arith.maximumf %45, %46 : vector<8x128xf32>
    %c7 = arith.constant 7 : index
    %c0_34 = arith.constant 0 : index
    %c0_35 = arith.constant 0 : index
    %48 = vector.load %arg1[%c7, %c0_34, %c0_35] : memref<17x128x128xbf16, #tpu.memory_space<vmem>>, vector<1x128x128xbf16>
    %49 = vector.shape_cast %48 : vector<1x128x128xbf16> to vector<128x128xbf16>
    %50 = arith.extf %49 : vector<128x128xbf16> to vector<128x128xf32>
    %cst_36 = arith.constant dense<0.000000e+00> : vector<8x128xf32>
    %51 = tpu.matmul %47, %50, %cst_36 {dimension_numbers = #tpu.dot_dimension_numbers<[1], [0], [0], [1], [0, 0, 1, 1], [], []>} : vector<8x128xf32>, vector<128x128xf32>, vector<8x128xf32> -> vector<8x128xf32>
    %c7_37 = arith.constant 7 : index
    %c0_38 = arith.constant 0 : index
    %c0_39 = arith.constant 0 : index
    %52 = vector.load %arg2[%c7_37, %c0_38, %c0_39] : memref<17x1x128xf32, #tpu.memory_space<vmem>>, vector<1x1x128xf32>
    %53 = vector.shape_cast %52 : vector<1x1x128xf32> to vector<1x128xf32>
    %54 = vector.broadcast %53 : vector<1x128xf32> to vector<8x128xf32>
    %55 = arith.addf %51, %54 : vector<8x128xf32>
    %cst_40 = arith.constant 0.000000e+00 : f32
    %56 = vector.broadcast %cst_40 : f32 to vector<8x128xf32>
    %57 = arith.maximumf %55, %56 : vector<8x128xf32>
    %c12 = arith.constant 12 : index
    %c0_41 = arith.constant 0 : index
    %c0_42 = arith.constant 0 : index
    %58 = vector.load %arg1[%c12, %c0_41, %c0_42] : memref<17x128x128xbf16, #tpu.memory_space<vmem>>, vector<1x128x128xbf16>
    %59 = vector.shape_cast %58 : vector<1x128x128xbf16> to vector<128x128xbf16>
    %60 = arith.extf %59 : vector<128x128xbf16> to vector<128x128xf32>
    %cst_43 = arith.constant dense<0.000000e+00> : vector<8x128xf32>
    %61 = tpu.matmul %57, %60, %cst_43 {dimension_numbers = #tpu.dot_dimension_numbers<[1], [0], [0], [1], [0, 0, 1, 1], [], []>} : vector<8x128xf32>, vector<128x128xf32>, vector<8x128xf32> -> vector<8x128xf32>
    %c12_44 = arith.constant 12 : index
    %c0_45 = arith.constant 0 : index
    %c0_46 = arith.constant 0 : index
    %62 = vector.load %arg2[%c12_44, %c0_45, %c0_46] : memref<17x1x128xf32, #tpu.memory_space<vmem>>, vector<1x1x128xf32>
    %63 = vector.shape_cast %62 : vector<1x1x128xf32> to vector<1x128xf32>
    %64 = vector.broadcast %63 : vector<1x128xf32> to vector<8x128xf32>
    %65 = arith.addf %61, %64 : vector<8x128xf32>
    %66 = arith.addf %37, %65 : vector<8x128xf32>
    %c3 = arith.constant 3 : index
    %c0_47 = arith.constant 0 : index
    %c0_48 = arith.constant 0 : index
    %67 = vector.load %arg1[%c3, %c0_47, %c0_48] : memref<17x128x128xbf16, #tpu.memory_space<vmem>>, vector<1x128x128xbf16>
    %68 = vector.shape_cast %67 : vector<1x128x128xbf16> to vector<128x128xbf16>
    %69 = arith.extf %68 : vector<128x128xbf16> to vector<128x128xf32>
    %cst_49 = arith.constant dense<0.000000e+00> : vector<8x128xf32>
    %70 = tpu.matmul %66, %69, %cst_49 {dimension_numbers = #tpu.dot_dimension_numbers<[1], [0], [0], [1], [0, 0, 1, 1], [], []>} : vector<8x128xf32>, vector<128x128xf32>, vector<8x128xf32> -> vector<8x128xf32>
    %c3_50 = arith.constant 3 : index
    %c0_51 = arith.constant 0 : index
    %c0_52 = arith.constant 0 : index
    %71 = vector.load %arg2[%c3_50, %c0_51, %c0_52] : memref<17x1x128xf32, #tpu.memory_space<vmem>>, vector<1x1x128xf32>
    %72 = vector.shape_cast %71 : vector<1x1x128xf32> to vector<1x128xf32>
    %73 = vector.broadcast %72 : vector<1x128xf32> to vector<8x128xf32>
    %74 = arith.addf %70, %73 : vector<8x128xf32>
    %cst_53 = arith.constant 0.000000e+00 : f32
    %75 = vector.broadcast %cst_53 : f32 to vector<8x128xf32>
    %76 = arith.maximumf %74, %75 : vector<8x128xf32>
    %c8 = arith.constant 8 : index
    %c0_54 = arith.constant 0 : index
    %c0_55 = arith.constant 0 : index
    %77 = vector.load %arg1[%c8, %c0_54, %c0_55] : memref<17x128x128xbf16, #tpu.memory_space<vmem>>, vector<1x128x128xbf16>
    %78 = vector.shape_cast %77 : vector<1x128x128xbf16> to vector<128x128xbf16>
    %79 = arith.extf %78 : vector<128x128xbf16> to vector<128x128xf32>
    %cst_56 = arith.constant dense<0.000000e+00> : vector<8x128xf32>
    %80 = tpu.matmul %76, %79, %cst_56 {dimension_numbers = #tpu.dot_dimension_numbers<[1], [0], [0], [1], [0, 0, 1, 1], [], []>} : vector<8x128xf32>, vector<128x128xf32>, vector<8x128xf32> -> vector<8x128xf32>
    %c8_57 = arith.constant 8 : index
    %c0_58 = arith.constant 0 : index
    %c0_59 = arith.constant 0 : index
    %81 = vector.load %arg2[%c8_57, %c0_58, %c0_59] : memref<17x1x128xf32, #tpu.memory_space<vmem>>, vector<1x1x128xf32>
    %82 = vector.shape_cast %81 : vector<1x1x128xf32> to vector<1x128xf32>
    %83 = vector.broadcast %82 : vector<1x128xf32> to vector<8x128xf32>
    %84 = arith.addf %80, %83 : vector<8x128xf32>
    %cst_60 = arith.constant 0.000000e+00 : f32
    %85 = vector.broadcast %cst_60 : f32 to vector<8x128xf32>
    %86 = arith.maximumf %84, %85 : vector<8x128xf32>
    %c13 = arith.constant 13 : index
    %c0_61 = arith.constant 0 : index
    %c0_62 = arith.constant 0 : index
    %87 = vector.load %arg1[%c13, %c0_61, %c0_62] : memref<17x128x128xbf16, #tpu.memory_space<vmem>>, vector<1x128x128xbf16>
    %88 = vector.shape_cast %87 : vector<1x128x128xbf16> to vector<128x128xbf16>
    %89 = arith.extf %88 : vector<128x128xbf16> to vector<128x128xf32>
    %cst_63 = arith.constant dense<0.000000e+00> : vector<8x128xf32>
    %90 = tpu.matmul %86, %89, %cst_63 {dimension_numbers = #tpu.dot_dimension_numbers<[1], [0], [0], [1], [0, 0, 1, 1], [], []>} : vector<8x128xf32>, vector<128x128xf32>, vector<8x128xf32> -> vector<8x128xf32>
    %c13_64 = arith.constant 13 : index
    %c0_65 = arith.constant 0 : index
    %c0_66 = arith.constant 0 : index
    %91 = vector.load %arg2[%c13_64, %c0_65, %c0_66] : memref<17x1x128xf32, #tpu.memory_space<vmem>>, vector<1x1x128xf32>
    %92 = vector.shape_cast %91 : vector<1x1x128xf32> to vector<1x128xf32>
    %93 = vector.broadcast %92 : vector<1x128xf32> to vector<8x128xf32>
    %94 = arith.addf %90, %93 : vector<8x128xf32>
    %95 = arith.addf %66, %94 : vector<8x128xf32>
    %c4 = arith.constant 4 : index
    %c0_67 = arith.constant 0 : index
    %c0_68 = arith.constant 0 : index
    %96 = vector.load %arg1[%c4, %c0_67, %c0_68] : memref<17x128x128xbf16, #tpu.memory_space<vmem>>, vector<1x128x128xbf16>
    %97 = vector.shape_cast %96 : vector<1x128x128xbf16> to vector<128x128xbf16>
    %98 = arith.extf %97 : vector<128x128xbf16> to vector<128x128xf32>
    %cst_69 = arith.constant dense<0.000000e+00> : vector<8x128xf32>
    %99 = tpu.matmul %95, %98, %cst_69 {dimension_numbers = #tpu.dot_dimension_numbers<[1], [0], [0], [1], [0, 0, 1, 1], [], []>} : vector<8x128xf32>, vector<128x128xf32>, vector<8x128xf32> -> vector<8x128xf32>
    %c4_70 = arith.constant 4 : index
    %c0_71 = arith.constant 0 : index
    %c0_72 = arith.constant 0 : index
    %100 = vector.load %arg2[%c4_70, %c0_71, %c0_72] : memref<17x1x128xf32, #tpu.memory_space<vmem>>, vector<1x1x128xf32>
    %101 = vector.shape_cast %100 : vector<1x1x128xf32> to vector<1x128xf32>
    %102 = vector.broadcast %101 : vector<1x128xf32> to vector<8x128xf32>
    %103 = arith.addf %99, %102 : vector<8x128xf32>
    %cst_73 = arith.constant 0.000000e+00 : f32
    %104 = vector.broadcast %cst_73 : f32 to vector<8x128xf32>
    %105 = arith.maximumf %103, %104 : vector<8x128xf32>
    %c9 = arith.constant 9 : index
    %c0_74 = arith.constant 0 : index
    %c0_75 = arith.constant 0 : index
    %106 = vector.load %arg1[%c9, %c0_74, %c0_75] : memref<17x128x128xbf16, #tpu.memory_space<vmem>>, vector<1x128x128xbf16>
    %107 = vector.shape_cast %106 : vector<1x128x128xbf16> to vector<128x128xbf16>
    %108 = arith.extf %107 : vector<128x128xbf16> to vector<128x128xf32>
    %cst_76 = arith.constant dense<0.000000e+00> : vector<8x128xf32>
    %109 = tpu.matmul %105, %108, %cst_76 {dimension_numbers = #tpu.dot_dimension_numbers<[1], [0], [0], [1], [0, 0, 1, 1], [], []>} : vector<8x128xf32>, vector<128x128xf32>, vector<8x128xf32> -> vector<8x128xf32>
    %c9_77 = arith.constant 9 : index
    %c0_78 = arith.constant 0 : index
    %c0_79 = arith.constant 0 : index
    %110 = vector.load %arg2[%c9_77, %c0_78, %c0_79] : memref<17x1x128xf32, #tpu.memory_space<vmem>>, vector<1x1x128xf32>
    %111 = vector.shape_cast %110 : vector<1x1x128xf32> to vector<1x128xf32>
    %112 = vector.broadcast %111 : vector<1x128xf32> to vector<8x128xf32>
    %113 = arith.addf %109, %112 : vector<8x128xf32>
    %cst_80 = arith.constant 0.000000e+00 : f32
    %114 = vector.broadcast %cst_80 : f32 to vector<8x128xf32>
    %115 = arith.maximumf %113, %114 : vector<8x128xf32>
    %c14 = arith.constant 14 : index
    %c0_81 = arith.constant 0 : index
    %c0_82 = arith.constant 0 : index
    %116 = vector.load %arg1[%c14, %c0_81, %c0_82] : memref<17x128x128xbf16, #tpu.memory_space<vmem>>, vector<1x128x128xbf16>
    %117 = vector.shape_cast %116 : vector<1x128x128xbf16> to vector<128x128xbf16>
    %118 = arith.extf %117 : vector<128x128xbf16> to vector<128x128xf32>
    %cst_83 = arith.constant dense<0.000000e+00> : vector<8x128xf32>
    %119 = tpu.matmul %115, %118, %cst_83 {dimension_numbers = #tpu.dot_dimension_numbers<[1], [0], [0], [1], [0, 0, 1, 1], [], []>} : vector<8x128xf32>, vector<128x128xf32>, vector<8x128xf32> -> vector<8x128xf32>
    %c14_84 = arith.constant 14 : index
    %c0_85 = arith.constant 0 : index
    %c0_86 = arith.constant 0 : index
    %120 = vector.load %arg2[%c14_84, %c0_85, %c0_86] : memref<17x1x128xf32, #tpu.memory_space<vmem>>, vector<1x1x128xf32>
    %121 = vector.shape_cast %120 : vector<1x1x128xf32> to vector<1x128xf32>
    %122 = vector.broadcast %121 : vector<1x128xf32> to vector<8x128xf32>
    %123 = arith.addf %119, %122 : vector<8x128xf32>
    %124 = arith.addf %95, %123 : vector<8x128xf32>
    %c5 = arith.constant 5 : index
    %c0_87 = arith.constant 0 : index
    %c0_88 = arith.constant 0 : index
    %125 = vector.load %arg1[%c5, %c0_87, %c0_88] : memref<17x128x128xbf16, #tpu.memory_space<vmem>>, vector<1x128x128xbf16>
    %126 = vector.shape_cast %125 : vector<1x128x128xbf16> to vector<128x128xbf16>
    %127 = arith.extf %126 : vector<128x128xbf16> to vector<128x128xf32>
    %cst_89 = arith.constant dense<0.000000e+00> : vector<8x128xf32>
    %128 = tpu.matmul %124, %127, %cst_89 {dimension_numbers = #tpu.dot_dimension_numbers<[1], [0], [0], [1], [0, 0, 1, 1], [], []>} : vector<8x128xf32>, vector<128x128xf32>, vector<8x128xf32> -> vector<8x128xf32>
    %c5_90 = arith.constant 5 : index
    %c0_91 = arith.constant 0 : index
    %c0_92 = arith.constant 0 : index
    %129 = vector.load %arg2[%c5_90, %c0_91, %c0_92] : memref<17x1x128xf32, #tpu.memory_space<vmem>>, vector<1x1x128xf32>
    %130 = vector.shape_cast %129 : vector<1x1x128xf32> to vector<1x128xf32>
    %131 = vector.broadcast %130 : vector<1x128xf32> to vector<8x128xf32>
    %132 = arith.addf %128, %131 : vector<8x128xf32>
    %cst_93 = arith.constant 0.000000e+00 : f32
    %133 = vector.broadcast %cst_93 : f32 to vector<8x128xf32>
    %134 = arith.maximumf %132, %133 : vector<8x128xf32>
    %c10 = arith.constant 10 : index
    %c0_94 = arith.constant 0 : index
    %c0_95 = arith.constant 0 : index
    %135 = vector.load %arg1[%c10, %c0_94, %c0_95] : memref<17x128x128xbf16, #tpu.memory_space<vmem>>, vector<1x128x128xbf16>
    %136 = vector.shape_cast %135 : vector<1x128x128xbf16> to vector<128x128xbf16>
    %137 = arith.extf %136 : vector<128x128xbf16> to vector<128x128xf32>
    %cst_96 = arith.constant dense<0.000000e+00> : vector<8x128xf32>
    %138 = tpu.matmul %134, %137, %cst_96 {dimension_numbers = #tpu.dot_dimension_numbers<[1], [0], [0], [1], [0, 0, 1, 1], [], []>} : vector<8x128xf32>, vector<128x128xf32>, vector<8x128xf32> -> vector<8x128xf32>
    %c10_97 = arith.constant 10 : index
    %c0_98 = arith.constant 0 : index
    %c0_99 = arith.constant 0 : index
    %139 = vector.load %arg2[%c10_97, %c0_98, %c0_99] : memref<17x1x128xf32, #tpu.memory_space<vmem>>, vector<1x1x128xf32>
    %140 = vector.shape_cast %139 : vector<1x1x128xf32> to vector<1x128xf32>
    %141 = vector.broadcast %140 : vector<1x128xf32> to vector<8x128xf32>
    %142 = arith.addf %138, %141 : vector<8x128xf32>
    %cst_100 = arith.constant 0.000000e+00 : f32
    %143 = vector.broadcast %cst_100 : f32 to vector<8x128xf32>
    %144 = arith.maximumf %142, %143 : vector<8x128xf32>
    %c15 = arith.constant 15 : index
    %c0_101 = arith.constant 0 : index
    %c0_102 = arith.constant 0 : index
    %145 = vector.load %arg1[%c15, %c0_101, %c0_102] : memref<17x128x128xbf16, #tpu.memory_space<vmem>>, vector<1x128x128xbf16>
    %146 = vector.shape_cast %145 : vector<1x128x128xbf16> to vector<128x128xbf16>
    %147 = arith.extf %146 : vector<128x128xbf16> to vector<128x128xf32>
    %cst_103 = arith.constant dense<0.000000e+00> : vector<8x128xf32>
    %148 = tpu.matmul %144, %147, %cst_103 {dimension_numbers = #tpu.dot_dimension_numbers<[1], [0], [0], [1], [0, 0, 1, 1], [], []>} : vector<8x128xf32>, vector<128x128xf32>, vector<8x128xf32> -> vector<8x128xf32>
    %c15_104 = arith.constant 15 : index
    %c0_105 = arith.constant 0 : index
    %c0_106 = arith.constant 0 : index
    %149 = vector.load %arg2[%c15_104, %c0_105, %c0_106] : memref<17x1x128xf32, #tpu.memory_space<vmem>>, vector<1x1x128xf32>
    %150 = vector.shape_cast %149 : vector<1x1x128xf32> to vector<1x128xf32>
    %151 = vector.broadcast %150 : vector<1x128xf32> to vector<8x128xf32>
    %152 = arith.addf %148, %151 : vector<8x128xf32>
    %153 = arith.addf %124, %152 : vector<8x128xf32>
    %c16 = arith.constant 16 : index
    %c0_107 = arith.constant 0 : index
    %c0_108 = arith.constant 0 : index
    %154 = vector.load %arg1[%c16, %c0_107, %c0_108] : memref<17x128x128xbf16, #tpu.memory_space<vmem>>, vector<1x128x128xbf16>
    %155 = vector.shape_cast %154 : vector<1x128x128xbf16> to vector<128x128xbf16>
    %156 = arith.extf %155 : vector<128x128xbf16> to vector<128x128xf32>
    %cst_109 = arith.constant dense<0.000000e+00> : vector<8x128xf32>
    %157 = tpu.matmul %153, %156, %cst_109 {dimension_numbers = #tpu.dot_dimension_numbers<[1], [0], [0], [1], [0, 0, 1, 1], [], []>} : vector<8x128xf32>, vector<128x128xf32>, vector<8x128xf32> -> vector<8x128xf32>
    %c16_110 = arith.constant 16 : index
    %c0_111 = arith.constant 0 : index
    %c0_112 = arith.constant 0 : index
    %158 = vector.load %arg2[%c16_110, %c0_111, %c0_112] : memref<17x1x128xf32, #tpu.memory_space<vmem>>, vector<1x1x128xf32>
    %159 = vector.shape_cast %158 : vector<1x1x128xf32> to vector<1x128xf32>
    %160 = vector.broadcast %159 : vector<1x128xf32> to vector<8x128xf32>
    %161 = arith.addf %157, %160 : vector<8x128xf32>
    %c0_113 = arith.constant 0 : index
    %c0_114 = arith.constant 0 : index
    %162 = vector.load %arg3[%c0_113, %c0_114] : memref<8x128xf32, #tpu.memory_space<vmem>>, vector<8x128xf32>
    tpu.vector_store %arg3[%c0_113, %c0_114], %161 {strides = array<i32>} : memref<8x128xf32, #tpu.memory_space<vmem>>, vector<8x128xf32>,
    return
  }
}

</mosaic_0001>

<llo_original>
// kernel: mlp_forward.1
$region0: #{mlp_forward.1}
  #allocation0 [shape = 'u32[]', space=smem, size = 0x4, offset = 0x4, fixed_abs, tag = 'smem constant byte address 0x4 - core index']
  #allocation1 [shape = 'u32[144,128]{1,0:T(1,128)}', space=vmem, size = 0x12000, scoped, tag = 'internal scratch']
  %s0 = inlined_call_operand.hbm [shape: f32[8,16], index: 0, kind: input, shape index: {}]
  %s1 = inlined_call_operand.hbm [shape: bf16[17,128,128], index: 1, kind: input, shape index: {}]
  %s2 = inlined_call_operand.hbm [shape: f32[17,1,128], index: 2, kind: input, shape index: {}]
  %s3 = inlined_call_operand.hbm [shape: f32[8,128], index: 3, kind: output, shape index: {}]
  %s4 = sld [smem:[#allocation0]]
  $region34: #{mlp_forward.1} parent=0
    _
  %s6 = ssub.s32 1, %s4
  %s7 = scalar_select 0, %s6, %s4
  $region1: #{mlp_forward.1} parent=0
    #allocation2 [shape = 'u8[4096]{0}', space=vmem, size = 0x1000, scoped, tag = 'input window, operand 0, single buffered']
    #allocation3 [shape = 's32[1]{0}', space=sflag, size = 0x4, scoped, tag = 'scoped memory for mlp_forward.1']
    #allocation4 [shape = 's32[1]{0}', space=sflag, size = 0x4, scoped, tag = 'scoped memory for mlp_forward.1']
    #allocation5 [shape = 'u8[557056]{0}', space=vmem, size = 0x88000, scoped, tag = 'input window, operand 1, single buffered']
    #allocation6 [shape = 's32[1]{0}', space=sflag, size = 0x4, scoped, tag = 'scoped memory for mlp_forward.1']
    #allocation7 [shape = 'u8[8704]{0}', space=vmem, size = 0x2400, scoped, tag = 'input window, operand 2, single buffered']
    #allocation8 [shape = 'u8[4096]{0}', space=vmem, size = 0x1000, scoped, tag = 'output window, operand 0, single buffered']
    %8 = vsyncpa [#allocation3], 0
    %9 = vsyncpa [#allocation6], 0
    %10 = vsyncpa [#allocation4], 0
    // Predicated region
    $region2: #{mlp_forward.1} parent=1 // pred_check
      _
    $region3: #{mlp_forward.1} parent=1 // pred_check_branch
      %12 = sbr.rel (0) target = $region5
    $region4: #{mlp_forward.1} parent=1 // pred_region
      %s14 = ssub.s32 128, 128
      %15 = vsyncadd [#allocation3], %s14
      %s17 = sshll.u32 [#allocation2], 4
      %s18 = int_to_ptr.vmem [resolvable:$true] %s17
      %20 = dma.hbm_to_vmem [thread:$0]  %s0, 128, %s18, [#allocation3]
    $region5: #{mlp_forward.1} parent=1 // pred_fallthru
      _
    // Predicated region
    $region6: #{mlp_forward.1} parent=1 // pred_check
      _
    $region7: #{mlp_forward.1} parent=1 // pred_check_branch
      %22 = sbr.rel (0) target = $region9
    $region8: #{mlp_forward.1} parent=1 // pred_region
      %s24 = ssub.s32 17408, 17408
      %25 = vsyncadd [#allocation6], %s24
      %s26 = sshll.u32 [#allocation5], 4
      %s27 = int_to_ptr.vmem [resolvable:$true] %s26
      %32 = dma.hbm_to_vmem [thread:$0]  %s1, 17408, %s27, [#allocation6], 64, 64, 4
    $region9: #{mlp_forward.1} parent=1 // pred_fallthru
      _
    // Predicated region
    $region10: #{mlp_forward.1} parent=1 // pred_check
      _
    $region11: #{mlp_forward.1} parent=1 // pred_check_branch
      %34 = sbr.rel (0) target = $region13
    $region12: #{mlp_forward.1} parent=1 // pred_region
      %s36 = ssub.s32 272, 272
      %37 = vsyncadd [#allocation6], %s36
      %s38 = sshll.u32 [#allocation7], 4
      %s39 = int_to_ptr.vmem [resolvable:$true] %s38
      %44 = dma.hbm_to_vmem [thread:$0]  %s2, 272, %s39, [#allocation6], 16, 16, 1
    $region13: #{mlp_forward.1} parent=1 // pred_fallthru
      _
    // Predicated region
    $region14: #{mlp_forward.1} parent=1 // pred_check
      _
    $region15: #{mlp_forward.1} parent=1 // pred_check_branch
      %46 = sbr.rel (0) target = $region17
    $region16: #{mlp_forward.1} parent=1 // pred_region
      %47 = dma.done [#allocation3], 128
    $region17: #{mlp_forward.1} parent=1 // pred_fallthru
      _
    // Predicated region
    $region18: #{mlp_forward.1} parent=1 // pred_check
      _
    $region19: #{mlp_forward.1} parent=1 // pred_check_branch
      %49 = sbr.rel (0) target = $region21
    $region20: #{mlp_forward.1} parent=1 // pred_region
      %50 = dma.done [#allocation6], 17408
    $region21: #{mlp_forward.1} parent=1 // pred_fallthru
      _
    // Predicated region
    $region22: #{mlp_forward.1} parent=1 // pred_check
      _
    $region23: #{mlp_forward.1} parent=1 // pred_check_branch
      %52 = sbr.rel (0) target = $region25
    $region24: #{mlp_forward.1} parent=1 // pred_region
      %53 = dma.done [#allocation6], 272
    $region25: #{mlp_forward.1} parent=1 // pred_fallthru
      _
    %v54 = vld [vmem:[#allocation5] sm:$0xf]
    %v55 = vld [vmem:[#allocation5 + $0x4] sm:$0xf]
    %v56 = vunpack.c.l.bf16 %v54
    %v57 = vunpack.c.l.bf16 %v55
    %v58 = vld [vmem:[#allocation2] sm:$0xff]
    %v59 = vld [vmem:[#allocation7] sm:$0x1]
    %v61 = vlaneseq
    %v62 = vshrl.u32 %v61, 7
    %v63 = vsub.s32 0, %v62
    %v64 = vrot.slane %v59, %v63
    %vm66 = vcmask 130048
    %v68 = vsel %vm66, %v58, 0
    %70 = vmatprep.subr.mxu0 0.0
    %71 = vmatpush1.msra.mxu0 %v56
    %72 = vmatprep.subr.mxu0 0.0
    %73 = vmatpush1.msra.mxu0 %v57
    %74 = vmatprep.subr.mxu0 0.0
    %75 = vmatpush1.msra.mxu0 0.0
    %76 = vmatprep.subr.mxu0 0.0
    %77 = vmatpush1.msra.mxu0 0.0
    %78 = vmatprep.subr.mxu0 0.0
    %79 = vmatpush1.msra.mxu0 0.0
    %80 = vmatprep.subr.mxu0 0.0
    %81 = vmatpush1.msra.mxu0 0.0
    %82 = vmatprep.subr.mxu0 0.0
    %83 = vmatpush1.msra.mxu0 0.0
    %84 = vmatprep.subr.mxu0 0.0
    %85 = vmatpush1.msra.mxu0 0.0
    %86 = vmatprep.subr.mxu0 0.0
    %87 = vmatpush1.msra.mxu0 0.0
    %88 = vmatprep.subr.mxu0 0.0
    %89 = vmatpush1.msra.mxu0 0.0
    %90 = vmatprep.subr.mxu0 0.0
    %91 = vmatpush1.msra.mxu0 0.0
    %92 = vmatprep.subr.mxu0 0.0
    %93 = vmatpush1.msra.mxu0 0.0
    %94 = vmatprep.subr.mxu0 0.0
    %95 = vmatpush1.msra.mxu0 0.0
    %96 = vmatprep.subr.mxu0 0.0
    %97 = vmatpush1.msra.mxu0 0.0
    %98 = vmatprep.subr.mxu0 0.0
    %99 = vmatpush1.msra.mxu0 0.0
    %100 = vmatprep.subr.mxu0 0.0
    %101 = vmatpush1.msra.mxu0 0.0
    %102 = vmatprep.subr.mxu0 0.0
    %103 = vmatpush1.msra.mxu0 0.0
    %104 = vmatprep.subr.mxu0 0.0
    %105 = vmatpush1.msra.mxu0 0.0
    %106 = vmatprep.subr.mxu0 0.0
    %107 = vmatpush1.msra.mxu0 0.0
    %108 = vmatprep.subr.mxu0 0.0
    %109 = vmatpush1.msra.mxu0 0.0
    %110 = vmatprep.subr.mxu0 0.0
    %111 = vmatpush1.msra.mxu0 0.0
    %112 = vmatprep.subr.mxu0 0.0
    %113 = vmatpush1.msra.mxu0 0.0
    %114 = vmatprep.subr.mxu0 0.0
    %115 = vmatpush1.msra.mxu0 0.0
    %116 = vmatprep.subr.mxu0 0.0
    %117 = vmatpush1.msra.mxu0 0.0
    %118 = vmatprep.subr.mxu0 0.0
    %119 = vmatpush1.msra.mxu0 0.0
    %120 = vmatprep.subr.mxu0 0.0
    %121 = vmatpush1.msra.mxu0 0.0
    %122 = vmatprep.subr.mxu0 0.0
    %123 = vmatpush1.msra.mxu0 0.0
    %124 = vmatprep.subr.mxu0 0.0
    %125 = vmatpush1.msra.mxu0 0.0
    %126 = vmatprep.subr.mxu0 0.0
    %127 = vmatpush1.msra.mxu0 0.0
    %128 = vmatprep.subr.mxu0 0.0
    %129 = vmatpush1.msra.mxu0 0.0
    %130 = vmatprep.subr.mxu0 0.0
    %131 = vmatpush1.msra.mxu0 0.0
    %132 = vmatprep.subr.mxu0 0.0
    %133 = vmatpush1.msra.mxu0 0.0
    %134 = vmatprep.mubr.f32.mxu0 0.0
    %135 = vmatmul.mubr.f32.gmra.mrb[0].mxu0 %v68
    %v136 = vpop.f32.mrb[0].mxu0
    %v137 = vadd.f32 %v64, %v136
    %v138 = vpop.f32.mrb[0].mxu0
    %139 = vdwg.mxu0
    %s140 = scalar_lea.vmem [#allocation5], 64
    %v141 = vld [vmem:[%s140] sm:$0xf]
    %v142 = vld [vmem:[%s140 + $0x4] sm:$0xf]
    %v143 = vld [vmem:[%s140 + $0x8] sm:$0xf]
    %v144 = vld [vmem:[%s140 + $0xc] sm:$0xf]
    %v145 = vld [vmem:[%s140 + $0x10] sm:$0xf]
    %v146 = vld [vmem:[%s140 + $0x14] sm:$0xf]
    %v147 = vld [vmem:[%s140 + $0x18] sm:$0xf]
    %v148 = vld [vmem:[%s140 + $0x1c] sm:$0xf]
    %v149 = vld [vmem:[%s140 + $0x20] sm:$0xf]
    %v150 = vld [vmem:[%s140 + $0x24] sm:$0xf]
    %v151 = vld [vmem:[%s140 + $0x28] sm:$0xf]
    %v152 = vld [vmem:[%s140 + $0x2c] sm:$0xf]
    %v153 = vld [vmem:[%s140 + $0x30] sm:$0xf]
    %v154 = vld [vmem:[%s140 + $0x34] sm:$0xf]
    %v155 = vld [vmem:[%s140 + $0x38] sm:$0xf]
    %v156 = vld [vmem:[%s140 + $0x3c] sm:$0xf]
    %v157 = vunpack.c.l.bf16 %v141
    %v158 = vunpack.c.l.bf16 %v142
    %v159 = vunpack.c.l.bf16 %v143
    %v160 = vunpack.c.l.bf16 %v144
    %v161 = vunpack.c.l.bf16 %v145
    %v162 = vunpack.c.l.bf16 %v146
    %v163 = vunpack.c.l.bf16 %v147
    %v164 = vunpack.c.l.bf16 %v148
    %v165 = vunpack.c.l.bf16 %v149
    %v166 = vunpack.c.l.bf16 %v150
    %v167 = vunpack.c.l.bf16 %v151
    %v168 = vunpack.c.l.bf16 %v152
    %v169 = vunpack.c.l.bf16 %v153
    %v170 = vunpack.c.l.bf16 %v154
    %v171 = vunpack.c.l.bf16 %v155
    %v172 = vunpack.c.l.bf16 %v156
    %s173 = scalar_lea.vmem [#allocation7], 1
    %v174 = vld [vmem:[%s173] sm:$0x1]
    %v176 = vlaneseq
    %v177 = vshrl.u32 %v176, 7
    %v178 = vsub.s32 0, %v177
    %v179 = vrot.slane %v174, %v178
    %181 = vmatprep.subr.mxu0 0.0
    %182 = vmatpush1.msra.mxu0 %v157
    %183 = vmatprep.subr.mxu0 0.0
    %184 = vmatpush1.msra.mxu0 %v158
    %185 = vmatprep.subr.mxu0 0.0
    %186 = vmatpush1.msra.mxu0 %v159
    %187 = vmatprep.subr.mxu0 0.0
    %188 = vmatpush1.msra.mxu0 %v160
    %189 = vmatprep.subr.mxu0 0.0
    %190 = vmatpush1.msra.mxu0 %v161
    %191 = vmatprep.subr.mxu0 0.0
    %192 = vmatpush1.msra.mxu0 %v162
    %193 = vmatprep.subr.mxu0 0.0
    %194 = vmatpush1.msra.mxu0 %v163
    %195 = vmatprep.subr.mxu0 0.0
    %196 = vmatpush1.msra.mxu0 %v164
    %197 = vmatprep.subr.mxu0 0.0
    %198 = vmatpush1.msra.mxu0 %v165
    %199 = vmatprep.subr.mxu0 0.0
    %200 = vmatpush1.msra.mxu0 %v166
    %201 = vmatprep.subr.mxu0 0.0
    %202 = vmatpush1.msra.mxu0 %v167
    %203 = vmatprep.subr.mxu0 0.0
    %204 = vmatpush1.msra.mxu0 %v168
    %205 = vmatprep.subr.mxu0 0.0
    %206 = vmatpush1.msra.mxu0 %v169
    %207 = vmatprep.subr.mxu0 0.0
    %208 = vmatpush1.msra.mxu0 %v170
    %209 = vmatprep.subr.mxu0 0.0
    %210 = vmatpush1.msra.mxu0 %v171
    %211 = vmatprep.subr.mxu0 0.0
    %212 = vmatpush1.msra.mxu0 %v172
    %213 = vmatprep.subr.mxu0 0.0
    %214 = vmatpush1.msra.mxu0 0.0
    %215 = vmatprep.subr.mxu0 0.0
    %216 = vmatpush1.msra.mxu0 0.0
    %217 = vmatprep.subr.mxu0 0.0
    %218 = vmatpush1.msra.mxu0 0.0
    %219 = vmatprep.subr.mxu0 0.0
    %220 = vmatpush1.msra.mxu0 0.0
    %221 = vmatprep.subr.mxu0 0.0
    %222 = vmatpush1.msra.mxu0 0.0
    %223 = vmatprep.subr.mxu0 0.0
    %224 = vmatpush1.msra.mxu0 0.0
    %225 = vmatprep.subr.mxu0 0.0
    %226 = vmatpush1.msra.mxu0 0.0
    %227 = vmatprep.subr.mxu0 0.0
    %228 = vmatpush1.msra.mxu0 0.0
    %229 = vmatprep.subr.mxu0 0.0
    %230 = vmatpush1.msra.mxu0 0.0
    %231 = vmatprep.subr.mxu0 0.0
    %232 = vmatpush1.msra.mxu0 0.0
    %233 = vmatprep.subr.mxu0 0.0
    %234 = vmatpush1.msra.mxu0 0.0
    %235 = vmatprep.subr.mxu0 0.0
    %236 = vmatpush1.msra.mxu0 0.0
    %237 = vmatprep.subr.mxu0 0.0
    %238 = vmatpush1.msra.mxu0 0.0
    %239 = vmatprep.subr.mxu0 0.0
    %240 = vmatpush1.msra.mxu0 0.0
    %241 = vmatprep.subr.mxu0 0.0
    %242 = vmatpush1.msra.mxu0 0.0
    %243 = vmatprep.subr.mxu0 0.0
    %244 = vmatpush1.msra.mxu0 0.0
    %245 = vmatprep.mubr.f32.mxu0 0.0
    %246 = vmatmul.mubr.f32.gmra.mrb[0].mxu0 %v137
    %v247 = vpop.f32.mrb[0].mxu0
    %v248 = vadd.f32 %v179, %v247
    %v249 = vpop.f32.mrb[0].mxu0
    %250 = vdwg.mxu0
    %v251 = vmax.f32 %v248, 0.0
    %s252 = scalar_lea.vmem [#allocation5], 384
    %v253 = vld [vmem:[%s252] sm:$0xf]
    %v254 = vld [vmem:[%s252 + $0x4] sm:$0xf]
    %v255 = vld [vmem:[%s252 + $0x8] sm:$0xf]
    %v256 = vld [vmem:[%s252 + $0xc] sm:$0xf]
    %v257 = vld [vmem:[%s252 + $0x10] sm:$0xf]
    %v258 = vld [vmem:[%s252 + $0x14] sm:$0xf]
    %v259 = vld [vmem:[%s252 + $0x18] sm:$0xf]
    %v260 = vld [vmem:[%s252 + $0x1c] sm:$0xf]
    %v261 = vld [vmem:[%s252 + $0x20] sm:$0xf]
    %v262 = vld [vmem:[%s252 + $0x24] sm:$0xf]
    %v263 = vld [vmem:[%s252 + $0x28] sm:$0xf]
    %v264 = vld [vmem:[%s252 + $0x2c] sm:$0xf]
    %v265 = vld [vmem:[%s252 + $0x30] sm:$0xf]
    %v266 = vld [vmem:[%s252 + $0x34] sm:$0xf]
    %v267 = vld [vmem:[%s252 + $0x38] sm:$0xf]
    %v268 = vld [vmem:[%s252 + $0x3c] sm:$0xf]
    %v269 = vunpack.c.l.bf16 %v253
    %v270 = vunpack.c.l.bf16 %v254
    %v271 = vunpack.c.l.bf16 %v255
    %v272 = vunpack.c.l.bf16 %v256
    %v273 = vunpack.c.l.bf16 %v257
    %v274 = vunpack.c.l.bf16 %v258
    %v275 = vunpack.c.l.bf16 %v259
    %v276 = vunpack.c.l.bf16 %v260
    %v277 = vunpack.c.l.bf16 %v261
    %v278 = vunpack.c.l.bf16 %v262
    %v279 = vunpack.c.l.bf16 %v263
    %v280 = vunpack.c.l.bf16 %v264
    %v281 = vunpack.c.l.bf16 %v265
    %v282 = vunpack.c.l.bf16 %v266
    %v283 = vunpack.c.l.bf16 %v267
    %v284 = vunpack.c.l.bf16 %v268
    %s285 = scalar_lea.vmem [#allocation7], 6
    %v286 = vld [vmem:[%s285] sm:$0x1]
    %v288 = vlaneseq
    %v289 = vshrl.u32 %v288, 7
    %v290 = vsub.s32 0, %v289
    %v291 = vrot.slane %v286, %v290
    %293 = vmatprep.subr.mxu0 0.0
    %294 = vmatpush1.msra.mxu0 %v269
    %295 = vmatprep.subr.mxu0 0.0
    %296 = vmatpush1.msra.mxu0 %v270
    %297 = vmatprep.subr.mxu0 0.0
    %298 = vmatpush1.msra.mxu0 %v271
    %299 = vmatprep.subr.mxu0 0.0
    %300 = vmatpush1.msra.mxu0 %v272
    %301 = vmatprep.subr.mxu0 0.0
    %302 = vmatpush1.msra.mxu0 %v273
    %303 = vmatprep.subr.mxu0 0.0
    %304 = vmatpush1.msra.mxu0 %v274
    %305 = vmatprep.subr.mxu0 0.0
    %306 = vmatpush1.msra.mxu0 %v275
    %307 = vmatprep.subr.mxu0 0.0
    %308 = vmatpush1.msra.mxu0 %v276
    %309 = vmatprep.subr.mxu0 0.0
    %310 = vmatpush1.msra.mxu0 %v277
    %311 = vmatprep.subr.mxu0 0.0
    %312 = vmatpush1.msra.mxu0 %v278
    %313 = vmatprep.subr.mxu0 0.0
    %314 = vmatpush1.msra.mxu0 %v279
    %315 = vmatprep.subr.mxu0 0.0
    %316 = vmatpush1.msra.mxu0 %v280
    %317 = vmatprep.subr.mxu0 0.0
    %318 = vmatpush1.msra.mxu0 %v281
    %319 = vmatprep.subr.mxu0 0.0
    %320 = vmatpush1.msra.mxu0 %v282
    %321 = vmatprep.subr.mxu0 0.0
    %322 = vmatpush1.msra.mxu0 %v283
    %323 = vmatprep.subr.mxu0 0.0
    %324 = vmatpush1.msra.mxu0 %v284
    %325 = vmatprep.subr.mxu0 0.0
    %326 = vmatpush1.msra.mxu0 0.0
    %327 = vmatprep.subr.mxu0 0.0
    %328 = vmatpush1.msra.mxu0 0.0
    %329 = vmatprep.subr.mxu0 0.0
    %330 = vmatpush1.msra.mxu0 0.0
    %331 = vmatprep.subr.mxu0 0.0
    %332 = vmatpush1.msra.mxu0 0.0
    %333 = vmatprep.subr.mxu0 0.0
    %334 = vmatpush1.msra.mxu0 0.0
    %335 = vmatprep.subr.mxu0 0.0
    %336 = vmatpush1.msra.mxu0 0.0
    %337 = vmatprep.subr.mxu0 0.0
    %338 = vmatpush1.msra.mxu0 0.0
    %339 = vmatprep.subr.mxu0 0.0
    %340 = vmatpush1.msra.mxu0 0.0
    %341 = vmatprep.subr.mxu0 0.0
    %342 = vmatpush1.msra.mxu0 0.0
    %343 = vmatprep.subr.mxu0 0.0
    %344 = vmatpush1.msra.mxu0 0.0
    %345 = vmatprep.subr.mxu0 0.0
    %346 = vmatpush1.msra.mxu0 0.0
    %347 = vmatprep.subr.mxu0 0.0
    %348 = vmatpush1.msra.mxu0 0.0
    %349 = vmatprep.subr.mxu0 0.0
    %350 = vmatpush1.msra.mxu0 0.0
    %351 = vmatprep.subr.mxu0 0.0
    %352 = vmatpush1.msra.mxu0 0.0
    %353 = vmatprep.subr.mxu0 0.0
    %354 = vmatpush1.msra.mxu0 0.0
    %355 = vmatprep.subr.mxu0 0.0
    %356 = vmatpush1.msra.mxu0 0.0
    %357 = vmatprep.mubr.f32.mxu0 0.0
    %358 = vmatmul.mubr.f32.gmra.mrb[0].mxu0 %v251
    %v359 = vpop.f32.mrb[0].mxu0
    %v360 = vadd.f32 %v291, %v359
    %v361 = vpop.f32.mrb[0].mxu0
    %362 = vdwg.mxu0
    %v363 = vmax.f32 %v360, 0.0
    %s364 = scalar_lea.vmem [#allocation5], 704
    %v365 = vld [vmem:[%s364] sm:$0xf]
    %v366 = vld [vmem:[%s364 + $0x4] sm:$0xf]
    %v367 = vld [vmem:[%s364 + $0x8] sm:$0xf]
    %v368 = vld [vmem:[%s364 + $0xc] sm:$0xf]
    %v369 = vld [vmem:[%s364 + $0x10] sm:$0xf]
    %v370 = vld [vmem:[%s364 + $0x14] sm:$0xf]
    %v371 = vld [vmem:[%s364 + $0x18] sm:$0xf]
    %v372 = vld [vmem:[%s364 + $0x1c] sm:$0xf]
    %v373 = vld [vmem:[%s364 + $0x20] sm:$0xf]
    %v374 = vld [vmem:[%s364 + $0x24] sm:$0xf]
    %v375 = vld [vmem:[%s364 + $0x28] sm:$0xf]
    %v376 = vld [vmem:[%s364 + $0x2c] sm:$0xf]
    %v377 = vld [vmem:[%s364 + $0x30] sm:$0xf]
    %v378 = vld [vmem:[%s364 + $0x34] sm:$0xf]
    %v379 = vld [vmem:[%s364 + $0x38] sm:$0xf]
    %v380 = vld [vmem:[%s364 + $0x3c] sm:$0xf]
    %v381 = vunpack.c.l.bf16 %v365
    %v382 = vunpack.c.l.bf16 %v366
    %v383 = vunpack.c.l.bf16 %v367
    %v384 = vunpack.c.l.bf16 %v368
    %v385 = vunpack.c.l.bf16 %v369
    %v386 = vunpack.c.l.bf16 %v370
    %v387 = vunpack.c.l.bf16 %v371
    %v388 = vunpack.c.l.bf16 %v372
    %v389 = vunpack.c.l.bf16 %v373
    %v390 = vunpack.c.l.bf16 %v374
    %v391 = vunpack.c.l.bf16 %v375
    %v392 = vunpack.c.l.bf16 %v376
    %v393 = vunpack.c.l.bf16 %v377
    %v394 = vunpack.c.l.bf16 %v378
    %v395 = vunpack.c.l.bf16 %v379
    %v396 = vunpack.c.l.bf16 %v380
    %s397 = scalar_lea.vmem [#allocation7], 11
    %v398 = vld [vmem:[%s397] sm:$0x1]
    %v400 = vlaneseq
    %v401 = vshrl.u32 %v400, 7
    %v402 = vsub.s32 0, %v401
    %v403 = vrot.slane %v398, %v402
    %405 = vmatprep.subr.mxu0 0.0
    %406 = vmatpush1.msra.mxu0 %v381
    %407 = vmatprep.subr.mxu0 0.0
    %408 = vmatpush1.msra.mxu0 %v382
    %409 = vmatprep.subr.mxu0 0.0
    %410 = vmatpush1.msra.mxu0 %v383
    %411 = vmatprep.subr.mxu0 0.0
    %412 = vmatpush1.msra.mxu0 %v384
    %413 = vmatprep.subr.mxu0 0.0
    %414 = vmatpush1.msra.mxu0 %v385
    %415 = vmatprep.subr.mxu0 0.0
    %416 = vmatpush1.msra.mxu0 %v386
    %417 = vmatprep.subr.mxu0 0.0
    %418 = vmatpush1.msra.mxu0 %v387
    %419 = vmatprep.subr.mxu0 0.0
    %420 = vmatpush1.msra.mxu0 %v388
    %421 = vmatprep.subr.mxu0 0.0
    %422 = vmatpush1.msra.mxu0 %v389
    %423 = vmatprep.subr.mxu0 0.0
    %424 = vmatpush1.msra.mxu0 %v390
    %425 = vmatprep.subr.mxu0 0.0
    %426 = vmatpush1.msra.mxu0 %v391
    %427 = vmatprep.subr.mxu0 0.0
    %428 = vmatpush1.msra.mxu0 %v392
    %429 = vmatprep.subr.mxu0 0.0
    %430 = vmatpush1.msra.mxu0 %v393
    %431 = vmatprep.subr.mxu0 0.0
    %432 = vmatpush1.msra.mxu0 %v394
    %433 = vmatprep.subr.mxu0 0.0
    %434 = vmatpush1.msra.mxu0 %v395
    %435 = vmatprep.subr.mxu0 0.0
    %436 = vmatpush1.msra.mxu0 %v396
    %437 = vmatprep.subr.mxu0 0.0
    %438 = vmatpush1.msra.mxu0 0.0
    %439 = vmatprep.subr.mxu0 0.0
    %440 = vmatpush1.msra.mxu0 0.0
    %441 = vmatprep.subr.mxu0 0.0
    %442 = vmatpush1.msra.mxu0 0.0
    %443 = vmatprep.subr.mxu0 0.0
    %444 = vmatpush1.msra.mxu0 0.0
    %445 = vmatprep.subr.mxu0 0.0
    %446 = vmatpush1.msra.mxu0 0.0
    %447 = vmatprep.subr.mxu0 0.0
    %448 = vmatpush1.msra.mxu0 0.0
    %449 = vmatprep.subr.mxu0 0.0
    %450 = vmatpush1.msra.mxu0 0.0
    %451 = vmatprep.subr.mxu0 0.0
    %452 = vmatpush1.msra.mxu0 0.0
    %453 = vmatprep.subr.mxu0 0.0
    %454 = vmatpush1.msra.mxu0 0.0
    %455 = vmatprep.subr.mxu0 0.0
    %456 = vmatpush1.msra.mxu0 0.0
    %457 = vmatprep.subr.mxu0 0.0
    %458 = vmatpush1.msra.mxu0 0.0
    %459 = vmatprep.subr.mxu0 0.0
    %460 = vmatpush1.msra.mxu0 0.0
    %461 = vmatprep.subr.mxu0 0.0
    %462 = vmatpush1.msra.mxu0 0.0
    %463 = vmatprep.subr.mxu0 0.0
    %464 = vmatpush1.msra.mxu0 0.0
    %465 = vmatprep.subr.mxu0 0.0
    %466 = vmatpush1.msra.mxu0 0.0
    %467 = vmatprep.subr.mxu0 0.0
    %468 = vmatpush1.msra.mxu0 0.0
    %469 = vmatprep.mubr.f32.mxu0 0.0
    %470 = vmatmul.mubr.f32.gmra.mrb[0].mxu0 %v363
    %v471 = vpop.f32.mrb[0].mxu0
    %v472 = vadd.f32 %v403, %v471
    %v473 = vpop.f32.mrb[0].mxu0
    %474 = vdwg.mxu0
    %v475 = vadd.f32 %v137, %v472
    %s476 = scalar_lea.vmem [#allocation5], 128
    %v477 = vld [vmem:[%s476] sm:$0xf]
    %v478 = vld [vmem:[%s476 + $0x4] sm:$0xf]
    %v479 = vld [vmem:[%s476 + $0x8] sm:$0xf]
    %v480 = vld [vmem:[%s476 + $0xc] sm:$0xf]
    %v481 = vld [vmem:[%s476 + $0x10] sm:$0xf]
    %v482 = vld [vmem:[%s476 + $0x14] sm:$0xf]
    %v483 = vld [vmem:[%s476 + $0x18] sm:$0xf]
    %v484 = vld [vmem:[%s476 + $0x1c] sm:$0xf]
    %v485 = vld [vmem:[%s476 + $0x20] sm:$0xf]
    %v486 = vld [vmem:[%s476 + $0x24] sm:$0xf]
    %v487 = vld [vmem:[%s476 + $0x28] sm:$0xf]
    %v488 = vld [vmem:[%s476 + $0x2c] sm:$0xf]
    %v489 = vld [vmem:[%s476 + $0x30] sm:$0xf]
    %v490 = vld [vmem:[%s476 + $0x34] sm:$0xf]
    %v491 = vld [vmem:[%s476 + $0x38] sm:$0xf]
    %v492 = vld [vmem:[%s476 + $0x3c] sm:$0xf]
    %v493 = vunpack.c.l.bf16 %v477
    %v494 = vunpack.c.l.bf16 %v478
    %v495 = vunpack.c.l.bf16 %v479
    %v496 = vunpack.c.l.bf16 %v480
    %v497 = vunpack.c.l.bf16 %v481
    %v498 = vunpack.c.l.bf16 %v482
    %v499 = vunpack.c.l.bf16 %v483
    %v500 = vunpack.c.l.bf16 %v484
    %v501 = vunpack.c.l.bf16 %v485
    %v502 = vunpack.c.l.bf16 %v486
    %v503 = vunpack.c.l.bf16 %v487
    %v504 = vunpack.c.l.bf16 %v488
    %v505 = vunpack.c.l.bf16 %v489
    %v506 = vunpack.c.l.bf16 %v490
    %v507 = vunpack.c.l.bf16 %v491
    %v508 = vunpack.c.l.bf16 %v492
    %s509 = scalar_lea.vmem [#allocation7], 2
    %v510 = vld [vmem:[%s509] sm:$0x1]
    %v512 = vlaneseq
    %v513 = vshrl.u32 %v512, 7
    %v514 = vsub.s32 0, %v513
    %v515 = vrot.slane %v510, %v514
    %517 = vmatprep.subr.mxu0 0.0
    %518 = vmatpush1.msra.mxu0 %v493
    %519 = vmatprep.subr.mxu0 0.0
    %520 = vmatpush1.msra.mxu0 %v494
    %521 = vmatprep.subr.mxu0 0.0
    %522 = vmatpush1.msra.mxu0 %v495
    %523 = vmatprep.subr.mxu0 0.0
    %524 = vmatpush1.msra.mxu0 %v496
    %525 = vmatprep.subr.mxu0 0.0
    %526 = vmatpush1.msra.mxu0 %v497
    %527 = vmatprep.subr.mxu0 0.0
    %528 = vmatpush1.msra.mxu0 %v498
    %529 = vmatprep.subr.mxu0 0.0
    %530 = vmatpush1.msra.mxu0 %v499
    %531 = vmatprep.subr.mxu0 0.0
    %532 = vmatpush1.msra.mxu0 %v500
    %533 = vmatprep.subr.mxu0 0.0
    %534 = vmatpush1.msra.mxu0 %v501
    %535 = vmatprep.subr.mxu0 0.0
    %536 = vmatpush1.msra.mxu0 %v502
    %537 = vmatprep.subr.mxu0 0.0
    %538 = vmatpush1.msra.mxu0 %v503
    %539 = vmatprep.subr.mxu0 0.0
    %540 = vmatpush1.msra.mxu0 %v504
    %541 = vmatprep.subr.mxu0 0.0
    %542 = vmatpush1.msra.mxu0 %v505
    %543 = vmatprep.subr.mxu0 0.0
    %544 = vmatpush1.msra.mxu0 %v506
    %545 = vmatprep.subr.mxu0 0.0
    %546 = vmatpush1.msra.mxu0 %v507
    %547 = vmatprep.subr.mxu0 0.0
    %548 = vmatpush1.msra.mxu0 %v508
    %549 = vmatprep.subr.mxu0 0.0
    %550 = vmatpush1.msra.mxu0 0.0
    %551 = vmatprep.subr.mxu0 0.0
    %552 = vmatpush1.msra.mxu0 0.0
    %553 = vmatprep.subr.mxu0 0.0
    %554 = vmatpush1.msra.mxu0 0.0
    %555 = vmatprep.subr.mxu0 0.0
    %556 = vmatpush1.msra.mxu0 0.0
    %557 = vmatprep.subr.mxu0 0.0
    %558 = vmatpush1.msra.mxu0 0.0
    %559 = vmatprep.subr.mxu0 0.0
    %560 = vmatpush1.msra.mxu0 0.0
    %561 = vmatprep.subr.mxu0 0.0
    %562 = vmatpush1.msra.mxu0 0.0
    %563 = vmatprep.subr.mxu0 0.0
    %564 = vmatpush1.msra.mxu0 0.0
    %565 = vmatprep.subr.mxu0 0.0
    %566 = vmatpush1.msra.mxu0 0.0
    %567 = vmatprep.subr.mxu0 0.0
    %568 = vmatpush1.msra.mxu0 0.0
    %569 = vmatprep.subr.mxu0 0.0
    %570 = vmatpush1.msra.mxu0 0.0
    %571 = vmatprep.subr.mxu0 0.0
    %572 = vmatpush1.msra.mxu0 0.0
    %573 = vmatprep.subr.mxu0 0.0
    %574 = vmatpush1.msra.mxu0 0.0
    %575 = vmatprep.subr.mxu0 0.0
    %576 = vmatpush1.msra.mxu0 0.0
    %577 = vmatprep.subr.mxu0 0.0
    %578 = vmatpush1.msra.mxu0 0.0
    %579 = vmatprep.subr.mxu0 0.0
    %580 = vmatpush1.msra.mxu0 0.0
    %581 = vmatprep.mubr.f32.mxu0 0.0
    %582 = vmatmul.mubr.f32.gmra.mrb[0].mxu0 %v475
    %v583 = vpop.f32.mrb[0].mxu0
    %v584 = vadd.f32 %v515, %v583
    %v585 = vpop.f32.mrb[0].mxu0
    %586 = vdwg.mxu0
    %v587 = vmax.f32 %v584, 0.0
    %s588 = scalar_lea.vmem [#allocation5], 448
    %v589 = vld [vmem:[%s588] sm:$0xf]
    %v590 = vld [vmem:[%s588 + $0x4] sm:$0xf]
    %v591 = vld [vmem:[%s588 + $0x8] sm:$0xf]
    %v592 = vld [vmem:[%s588 + $0xc] sm:$0xf]
    %v593 = vld [vmem:[%s588 + $0x10] sm:$0xf]
    %v594 = vld [vmem:[%s588 + $0x14] sm:$0xf]
    %v595 = vld [vmem:[%s588 + $0x18] sm:$0xf]
    %v596 = vld [vmem:[%s588 + $0x1c] sm:$0xf]
    %v597 = vld [vmem:[%s588 + $0x20] sm:$0xf]
    %v598 = vld [vmem:[%s588 + $0x24] sm:$0xf]
    %v599 = vld [vmem:[%s588 + $0x28] sm:$0xf]
    %v600 = vld [vmem:[%s588 + $0x2c] sm:$0xf]
    %v601 = vld [vmem:[%s588 + $0x30] sm:$0xf]
    %v602 = vld [vmem:[%s588 + $0x34] sm:$0xf]
    %v603 = vld [vmem:[%s588 + $0x38] sm:$0xf]
    %v604 = vld [vmem:[%s588 + $0x3c] sm:$0xf]
    %v605 = vunpack.c.l.bf16 %v589
    %v606 = vunpack.c.l.bf16 %v590
    %v607 = vunpack.c.l.bf16 %v591
    %v608 = vunpack.c.l.bf16 %v592
    %v609 = vunpack.c.l.bf16 %v593
    %v610 = vunpack.c.l.bf16 %v594
    %v611 = vunpack.c.l.bf16 %v595
    %v612 = vunpack.c.l.bf16 %v596
    %v613 = vunpack.c.l.bf16 %v597
    %v614 = vunpack.c.l.bf16 %v598
    %v615 = vunpack.c.l.bf16 %v599
    %v616 = vunpack.c.l.bf16 %v600
    %v617 = vunpack.c.l.bf16 %v601
    %v618 = vunpack.c.l.bf16 %v602
    %v619 = vunpack.c.l.bf16 %v603
    %v620 = vunpack.c.l.bf16 %v604
    %s621 = scalar_lea.vmem [#allocation7], 7
    %v622 = vld [vmem:[%s621] sm:$0x1]
    %v624 = vlaneseq
    %v625 = vshrl.u32 %v624, 7
    %v626 = vsub.s32 0, %v625
    %v627 = vrot.slane %v622, %v626
    %629 = vmatprep.subr.mxu0 0.0
    %630 = vmatpush1.msra.mxu0 %v605
    %631 = vmatprep.subr.mxu0 0.0
    %632 = vmatpush1.msra.mxu0 %v606
    %633 = vmatprep.subr.mxu0 0.0
    %634 = vmatpush1.msra.mxu0 %v607
    %635 = vmatprep.subr.mxu0 0.0
    %636 = vmatpush1.msra.mxu0 %v608
    %637 = vmatprep.subr.mxu0 0.0
    %638 = vmatpush1.msra.mxu0 %v609
    %639 = vmatprep.subr.mxu0 0.0
    %640 = vmatpush1.msra.mxu0 %v610
    %641 = vmatprep.subr.mxu0 0.0
    %642 = vmatpush1.msra.mxu0 %v611
    %643 = vmatprep.subr.mxu0 0.0
    %644 = vmatpush1.msra.mxu0 %v612
    %645 = vmatprep.subr.mxu0 0.0
    %646 = vmatpush1.msra.mxu0 %v613
    %647 = vmatprep.subr.mxu0 0.0
    %648 = vmatpush1.msra.mxu0 %v614
    %649 = vmatprep.subr.mxu0 0.0
    %650 = vmatpush1.msra.mxu0 %v615
    %651 = vmatprep.subr.mxu0 0.0
    %652 = vmatpush1.msra.mxu0 %v616
    %653 = vmatprep.subr.mxu0 0.0
    %654 = vmatpush1.msra.mxu0 %v617
    %655 = vmatprep.subr.mxu0 0.0
    %656 = vmatpush1.msra.mxu0 %v618
    %657 = vmatprep.subr.mxu0 0.0
    %658 = vmatpush1.msra.mxu0 %v619
    %659 = vmatprep.subr.mxu0 0.0
    %660 = vmatpush1.msra.mxu0 %v620
    %661 = vmatprep.subr.mxu0 0.0
    %662 = vmatpush1.msra.mxu0 0.0
    %663 = vmatprep.subr.mxu0 0.0
    %664 = vmatpush1.msra.mxu0 0.0
    %665 = vmatprep.subr.mxu0 0.0
    %666 = vmatpush1.msra.mxu0 0.0
    %667 = vmatprep.subr.mxu0 0.0
    %668 = vmatpush1.msra.mxu0 0.0
    %669 = vmatprep.subr.mxu0 0.0
    %670 = vmatpush1.msra.mxu0 0.0
    %671 = vmatprep.subr.mxu0 0.0
    %672 = vmatpush1.msra.mxu0 0.0
    %673 = vmatprep.subr.mxu0 0.0
    %674 = vmatpush1.msra.mxu0 0.0
    %675 = vmatprep.subr.mxu0 0.0
    %676 = vmatpush1.msra.mxu0 0.0
    %677 = vmatprep.subr.mxu0 0.0
    %678 = vmatpush1.msra.mxu0 0.0
    %679 = vmatprep.subr.mxu0 0.0
    %680 = vmatpush1.msra.mxu0 0.0
    %681 = vmatprep.subr.mxu0 0.0
    %682 = vmatpush1.msra.mxu0 0.0
    %683 = vmatprep.subr.mxu0 0.0
    %684 = vmatpush1.msra.mxu0 0.0
    %685 = vmatprep.subr.mxu0 0.0
    %686 = vmatpush1.msra.mxu0 0.0
    %687 = vmatprep.subr.mxu0 0.0
    %688 = vmatpush1.msra.mxu0 0.0
    %689 = vmatprep.subr.mxu0 0.0
    %690 = vmatpush1.msra.mxu0 0.0
    %691 = vmatprep.subr.mxu0 0.0
    %692 = vmatpush1.msra.mxu0 0.0
    %693 = vmatprep.mubr.f32.mxu0 0.0
    %694 = vmatmul.mubr.f32.gmra.mrb[0].mxu0 %v587
    %v695 = vpop.f32.mrb[0].mxu0
    %v696 = vadd.f32 %v627, %v695
    %v697 = vpop.f32.mrb[0].mxu0
    %698 = vdwg.mxu0
    %v699 = vmax.f32 %v696, 0.0
    %s700 = scalar_lea.vmem [#allocation5], 768
    %v701 = vld [vmem:[%s700] sm:$0xf]
    %v702 = vld [vmem:[%s700 + $0x4] sm:$0xf]
    %v703 = vld [vmem:[%s700 + $0x8] sm:$0xf]
    %v704 = vld [vmem:[%s700 + $0xc] sm:$0xf]
    %v705 = vld [vmem:[%s700 + $0x10] sm:$0xf]
    %v706 = vld [vmem:[%s700 + $0x14] sm:$0xf]
    %v707 = vld [vmem:[%s700 + $0x18] sm:$0xf]
    %v708 = vld [vmem:[%s700 + $0x1c] sm:$0xf]
    %v709 = vld [vmem:[%s700 + $0x20] sm:$0xf]
    %v710 = vld [vmem:[%s700 + $0x24] sm:$0xf]
    %v711 = vld [vmem:[%s700 + $0x28] sm:$0xf]
    %v712 = vld [vmem:[%s700 + $0x2c] sm:$0xf]
    %v713 = vld [vmem:[%s700 + $0x30] sm:$0xf]
    %v714 = vld [vmem:[%s700 + $0x34] sm:$0xf]
    %v715 = vld [vmem:[%s700 + $0x38] sm:$0xf]
    %v716 = vld [vmem:[%s700 + $0x3c] sm:$0xf]
    %v717 = vunpack.c.l.bf16 %v701
    %v718 = vunpack.c.l.bf16 %v702
    %v719 = vunpack.c.l.bf16 %v703
    %v720 = vunpack.c.l.bf16 %v704
    %v721 = vunpack.c.l.bf16 %v705
    %v722 = vunpack.c.l.bf16 %v706
    %v723 = vunpack.c.l.bf16 %v707
    %v724 = vunpack.c.l.bf16 %v708
    %v725 = vunpack.c.l.bf16 %v709
    %v726 = vunpack.c.l.bf16 %v710
    %v727 = vunpack.c.l.bf16 %v711
    %v728 = vunpack.c.l.bf16 %v712
    %v729 = vunpack.c.l.bf16 %v713
    %v730 = vunpack.c.l.bf16 %v714
    %v731 = vunpack.c.l.bf16 %v715
    %v732 = vunpack.c.l.bf16 %v716
    %s733 = scalar_lea.vmem [#allocation7], 12
    %v734 = vld [vmem:[%s733] sm:$0x1]
    %v736 = vlaneseq
    %v737 = vshrl.u32 %v736, 7
    %v738 = vsub.s32 0, %v737
    %v739 = vrot.slane %v734, %v738
    %741 = vmatprep.subr.mxu0 0.0
    %742 = vmatpush1.msra.mxu0 %v717
    %743 = vmatprep.subr.mxu0 0.0
    %744 = vmatpush1.msra.mxu0 %v718
    %745 = vmatprep.subr.mxu0 0.0
    %746 = vmatpush1.msra.mxu0 %v719
    %747 = vmatprep.subr.mxu0 0.0
    %748 = vmatpush1.msra.mxu0 %v720
    %749 = vmatprep.subr.mxu0 0.0
    %750 = vmatpush1.msra.mxu0 %v721
    %751 = vmatprep.subr.mxu0 0.0
    %752 = vmatpush1.msra.mxu0 %v722
    %753 = vmatprep.subr.mxu0 0.0
    %754 = vmatpush1.msra.mxu0 %v723
    %755 = vmatprep.subr.mxu0 0.0
    %756 = vmatpush1.msra.mxu0 %v724
    %757 = vmatprep.subr.mxu0 0.0
    %758 = vmatpush1.msra.mxu0 %v725
    %759 = vmatprep.subr.mxu0 0.0
    %760 = vmatpush1.msra.mxu0 %v726
    %761 = vmatprep.subr.mxu0 0.0
    %762 = vmatpush1.msra.mxu0 %v727
    %763 = vmatprep.subr.mxu0 0.0
    %764 = vmatpush1.msra.mxu0 %v728
    %765 = vmatprep.subr.mxu0 0.0
    %766 = vmatpush1.msra.mxu0 %v729
    %767 = vmatprep.subr.mxu0 0.0
    %768 = vmatpush1.msra.mxu0 %v730
    %769 = vmatprep.subr.mxu0 0.0
    %770 = vmatpush1.msra.mxu0 %v731
    %771 = vmatprep.subr.mxu0 0.0
    %772 = vmatpush1.msra.mxu0 %v732
    %773 = vmatprep.subr.mxu0 0.0
    %774 = vmatpush1.msra.mxu0 0.0
    %775 = vmatprep.subr.mxu0 0.0
    %776 = vmatpush1.msra.mxu0 0.0
    %777 = vmatprep.subr.mxu0 0.0
    %778 = vmatpush1.msra.mxu0 0.0
    %779 = vmatprep.subr.mxu0 0.0
    %780 = vmatpush1.msra.mxu0 0.0
    %781 = vmatprep.subr.mxu0 0.0
    %782 = vmatpush1.msra.mxu0 0.0
    %783 = vmatprep.subr.mxu0 0.0
    %784 = vmatpush1.msra.mxu0 0.0
    %785 = vmatprep.subr.mxu0 0.0
    %786 = vmatpush1.msra.mxu0 0.0
    %787 = vmatprep.subr.mxu0 0.0
    %788 = vmatpush1.msra.mxu0 0.0
    %789 = vmatprep.subr.mxu0 0.0
    %790 = vmatpush1.msra.mxu0 0.0
    %791 = vmatprep.subr.mxu0 0.0
    %792 = vmatpush1.msra.mxu0 0.0
    %793 = vmatprep.subr.mxu0 0.0
    %794 = vmatpush1.msra.mxu0 0.0
    %795 = vmatprep.subr.mxu0 0.0
    %796 = vmatpush1.msra.mxu0 0.0
    %797 = vmatprep.subr.mxu0 0.0
    %798 = vmatpush1.msra.mxu0 0.0
    %799 = vmatprep.subr.mxu0 0.0
    %800 = vmatpush1.msra.mxu0 0.0
    %801 = vmatprep.subr.mxu0 0.0
    %802 = vmatpush1.msra.mxu0 0.0
    %803 = vmatprep.subr.mxu0 0.0
    %804 = vmatpush1.msra.mxu0 0.0
    %805 = vmatprep.mubr.f32.mxu0 0.0
    %806 = vmatmul.mubr.f32.gmra.mrb[0].mxu0 %v699
    %v807 = vpop.f32.mrb[0].mxu0
    %v808 = vadd.f32 %v739, %v807
    %v809 = vpop.f32.mrb[0].mxu0
    %810 = vdwg.mxu0
    %v811 = vadd.f32 %v475, %v808
    %s812 = scalar_lea.vmem [#allocation5], 192
    %v813 = vld [vmem:[%s812] sm:$0xf]
    %v814 = vld [vmem:[%s812 + $0x4] sm:$0xf]
    %v815 = vld [vmem:[%s812 + $0x8] sm:$0xf]
    %v816 = vld [vmem:[%s812 + $0xc] sm:$0xf]
    %v817 = vld [vmem:[%s812 + $0x10] sm:$0xf]
    %v818 = vld [vmem:[%s812 + $0x14] sm:$0xf]
    %v819 = vld [vmem:[%s812 + $0x18] sm:$0xf]
    %v820 = vld [vmem:[%s812 + $0x1c] sm:$0xf]
    %v821 = vld [vmem:[%s812 + $0x20] sm:$0xf]
    %v822 = vld [vmem:[%s812 + $0x24] sm:$0xf]
    %v823 = vld [vmem:[%s812 + $0x28] sm:$0xf]
    %v824 = vld [vmem:[%s812 + $0x2c] sm:$0xf]
    %v825 = vld [vmem:[%s812 + $0x30] sm:$0xf]
    %v826 = vld [vmem:[%s812 + $0x34] sm:$0xf]
    %v827 = vld [vmem:[%s812 + $0x38] sm:$0xf]
    %v828 = vld [vmem:[%s812 + $0x3c] sm:$0xf]
    %v829 = vunpack.c.l.bf16 %v813
    %v830 = vunpack.c.l.bf16 %v814
    %v831 = vunpack.c.l.bf16 %v815
    %v832 = vunpack.c.l.bf16 %v816
    %v833 = vunpack.c.l.bf16 %v817
    %v834 = vunpack.c.l.bf16 %v818
    %v835 = vunpack.c.l.bf16 %v819
    %v836 = vunpack.c.l.bf16 %v820
    %v837 = vunpack.c.l.bf16 %v821
    %v838 = vunpack.c.l.bf16 %v822
    %v839 = vunpack.c.l.bf16 %v823
    %v840 = vunpack.c.l.bf16 %v824
    %v841 = vunpack.c.l.bf16 %v825
    %v842 = vunpack.c.l.bf16 %v826
    %v843 = vunpack.c.l.bf16 %v827
    %v844 = vunpack.c.l.bf16 %v828
    %s845 = scalar_lea.vmem [#allocation7], 3
    %v846 = vld [vmem:[%s845] sm:$0x1]
    %v848 = vlaneseq
    %v849 = vshrl.u32 %v848, 7
    %v850 = vsub.s32 0, %v849
    %v851 = vrot.slane %v846, %v850
    %853 = vmatprep.subr.mxu0 0.0
    %854 = vmatpush1.msra.mxu0 %v829
    %855 = vmatprep.subr.mxu0 0.0
    %856 = vmatpush1.msra.mxu0 %v830
    %857 = vmatprep.subr.mxu0 0.0
    %858 = vmatpush1.msra.mxu0 %v831
    %859 = vmatprep.subr.mxu0 0.0
    %860 = vmatpush1.msra.mxu0 %v832
    %861 = vmatprep.subr.mxu0 0.0
    %862 = vmatpush1.msra.mxu0 %v833
    %863 = vmatprep.subr.mxu0 0.0
    %864 = vmatpush1.msra.mxu0 %v834
    %865 = vmatprep.subr.mxu0 0.0
    %866 = vmatpush1.msra.mxu0 %v835
    %867 = vmatprep.subr.mxu0 0.0
    %868 = vmatpush1.msra.mxu0 %v836
    %869 = vmatprep.subr.mxu0 0.0
    %870 = vmatpush1.msra.mxu0 %v837
    %871 = vmatprep.subr.mxu0 0.0
    %872 = vmatpush1.msra.mxu0 %v838
    %873 = vmatprep.subr.mxu0 0.0
    %874 = vmatpush1.msra.mxu0 %v839
    %875 = vmatprep.subr.mxu0 0.0
    %876 = vmatpush1.msra.mxu0 %v840
    %877 = vmatprep.subr.mxu0 0.0
    %878 = vmatpush1.msra.mxu0 %v841
    %879 = vmatprep.subr.mxu0 0.0
    %880 = vmatpush1.msra.mxu0 %v842
    %881 = vmatprep.subr.mxu0 0.0
    %882 = vmatpush1.msra.mxu0 %v843
    %883 = vmatprep.subr.mxu0 0.0
    %884 = vmatpush1.msra.mxu0 %v844
    %885 = vmatprep.subr.mxu0 0.0
    %886 = vmatpush1.msra.mxu0 0.0
    %887 = vmatprep.subr.mxu0 0.0
    %888 = vmatpush1.msra.mxu0 0.0
    %889 = vmatprep.subr.mxu0 0.0
    %890 = vmatpush1.msra.mxu0 0.0
    %891 = vmatprep.subr.mxu0 0.0
    %892 = vmatpush1.msra.mxu0 0.0
    %893 = vmatprep.subr.mxu0 0.0
    %894 = vmatpush1.msra.mxu0 0.0
    %895 = vmatprep.subr.mxu0 0.0
    %896 = vmatpush1.msra.mxu0 0.0
    %897 = vmatprep.subr.mxu0 0.0
    %898 = vmatpush1.msra.mxu0 0.0
    %899 = vmatprep.subr.mxu0 0.0
    %900 = vmatpush1.msra.mxu0 0.0
    %901 = vmatprep.subr.mxu0 0.0
    %902 = vmatpush1.msra.mxu0 0.0
    %903 = vmatprep.subr.mxu0 0.0
    %904 = vmatpush1.msra.mxu0 0.0
    %905 = vmatprep.subr.mxu0 0.0
    %906 = vmatpush1.msra.mxu0 0.0
    %907 = vmatprep.subr.mxu0 0.0
    %908 = vmatpush1.msra.mxu0 0.0
    %909 = vmatprep.subr.mxu0 0.0
    %910 = vmatpush1.msra.mxu0 0.0
    %911 = vmatprep.subr.mxu0 0.0
    %912 = vmatpush1.msra.mxu0 0.0
    %913 = vmatprep.subr.mxu0 0.0
    %914 = vmatpush1.msra.mxu0 0.0
    %915 = vmatprep.subr.mxu0 0.0
    %916 = vmatpush1.msra.mxu0 0.0
    %917 = vmatprep.mubr.f32.mxu0 0.0
    %918 = vmatmul.mubr.f32.gmra.mrb[0].mxu0 %v811
    %v919 = vpop.f32.mrb[0].mxu0
    %v920 = vadd.f32 %v851, %v919
    %v921 = vpop.f32.mrb[0].mxu0
    %922 = vdwg.mxu0
    %v923 = vmax.f32 %v920, 0.0
    %s924 = scalar_lea.vmem [#allocation5], 512
    %v925 = vld [vmem:[%s924] sm:$0xf]
    %v926 = vld [vmem:[%s924 + $0x4] sm:$0xf]
    %v927 = vld [vmem:[%s924 + $0x8] sm:$0xf]
    %v928 = vld [vmem:[%s924 + $0xc] sm:$0xf]
    %v929 = vld [vmem:[%s924 + $0x10] sm:$0xf]
    %v930 = vld [vmem:[%s924 + $0x14] sm:$0xf]
    %v931 = vld [vmem:[%s924 + $0x18] sm:$0xf]
    %v932 = vld [vmem:[%s924 + $0x1c] sm:$0xf]
    %v933 = vld [vmem:[%s924 + $0x20] sm:$0xf]
    %v934 = vld [vmem:[%s924 + $0x24] sm:$0xf]
    %v935 = vld [vmem:[%s924 + $0x28] sm:$0xf]
    %v936 = vld [vmem:[%s924 + $0x2c] sm:$0xf]
    %v937 = vld [vmem:[%s924 + $0x30] sm:$0xf]
    %v938 = vld [vmem:[%s924 + $0x34] sm:$0xf]
    %v939 = vld [vmem:[%s924 + $0x38] sm:$0xf]
    %v940 = vld [vmem:[%s924 + $0x3c] sm:$0xf]
    %v941 = vunpack.c.l.bf16 %v925
    %v942 = vunpack.c.l.bf16 %v926
    %v943 = vunpack.c.l.bf16 %v927
    %v944 = vunpack.c.l.bf16 %v928
    %v945 = vunpack.c.l.bf16 %v929
    %v946 = vunpack.c.l.bf16 %v930
    %v947 = vunpack.c.l.bf16 %v931
    %v948 = vunpack.c.l.bf16 %v932
    %v949 = vunpack.c.l.bf16 %v933
    %v950 = vunpack.c.l.bf16 %v934
    %v951 = vunpack.c.l.bf16 %v935
    %v952 = vunpack.c.l.bf16 %v936
    %v953 = vunpack.c.l.bf16 %v937
    %v954 = vunpack.c.l.bf16 %v938
    %v955 = vunpack.c.l.bf16 %v939
    %v956 = vunpack.c.l.bf16 %v940
    %s957 = scalar_lea.vmem [#allocation7], 8
    %v958 = vld [vmem:[%s957] sm:$0x1]
    %v960 = vlaneseq
    %v961 = vshrl.u32 %v960, 7
    %v962 = vsub.s32 0, %v961
    %v963 = vrot.slane %v958, %v962
    %965 = vmatprep.subr.mxu0 0.0
    %966 = vmatpush1.msra.mxu0 %v941
    %967 = vmatprep.subr.mxu0 0.0
    %968 = vmatpush1.msra.mxu0 %v942
    %969 = vmatprep.subr.mxu0 0.0
    %970 = vmatpush1.msra.mxu0 %v943
    %971 = vmatprep.subr.mxu0 0.0
    %972 = vmatpush1.msra.mxu0 %v944
    %973 = vmatprep.subr.mxu0 0.0
    %974 = vmatpush1.msra.mxu0 %v945
    %975 = vmatprep.subr.mxu0 0.0
    %976 = vmatpush1.msra.mxu0 %v946
    %977 = vmatprep.subr.mxu0 0.0
    %978 = vmatpush1.msra.mxu0 %v947
    %979 = vmatprep.subr.mxu0 0.0
    %980 = vmatpush1.msra.mxu0 %v948
    %981 = vmatprep.subr.mxu0 0.0
    %982 = vmatpush1.msra.mxu0 %v949
    %983 = vmatprep.subr.mxu0 0.0
    %984 = vmatpush1.msra.mxu0 %v950
    %985 = vmatprep.subr.mxu0 0.0
    %986 = vmatpush1.msra.mxu0 %v951
    %987 = vmatprep.subr.mxu0 0.0
    %988 = vmatpush1.msra.mxu0 %v952
    %989 = vmatprep.subr.mxu0 0.0
    %990 = vmatpush1.msra.mxu0 %v953
    %991 = vmatprep.subr.mxu0 0.0
    %992 = vmatpush1.msra.mxu0 %v954
    %993 = vmatprep.subr.mxu0 0.0
    %994 = vmatpush1.msra.mxu0 %v955
    %995 = vmatprep.subr.mxu0 0.0
    %996 = vmatpush1.msra.mxu0 %v956
    %997 = vmatprep.subr.mxu0 0.0
    %998 = vmatpush1.msra.mxu0 0.0
    %999 = vmatprep.subr.mxu0 0.0
    %1000 = vmatpush1.msra.mxu0 0.0
    %1001 = vmatprep.subr.mxu0 0.0
    %1002 = vmatpush1.msra.mxu0 0.0
    %1003 = vmatprep.subr.mxu0 0.0
    %1004 = vmatpush1.msra.mxu0 0.0
    %1005 = vmatprep.subr.mxu0 0.0
    %1006 = vmatpush1.msra.mxu0 0.0
    %1007 = vmatprep.subr.mxu0 0.0
    %1008 = vmatpush1.msra.mxu0 0.0
    %1009 = vmatprep.subr.mxu0 0.0
    %1010 = vmatpush1.msra.mxu0 0.0
    %1011 = vmatprep.subr.mxu0 0.0
    %1012 = vmatpush1.msra.mxu0 0.0
    %1013 = vmatprep.subr.mxu0 0.0
    %1014 = vmatpush1.msra.mxu0 0.0
    %1015 = vmatprep.subr.mxu0 0.0
    %1016 = vmatpush1.msra.mxu0 0.0
    %1017 = vmatprep.subr.mxu0 0.0
    %1018 = vmatpush1.msra.mxu0 0.0
    %1019 = vmatprep.subr.mxu0 0.0
    %1020 = vmatpush1.msra.mxu0 0.0
    %1021 = vmatprep.subr.mxu0 0.0
    %1022 = vmatpush1.msra.mxu0 0.0
    %1023 = vmatprep.subr.mxu0 0.0
    %1024 = vmatpush1.msra.mxu0 0.0
    %1025 = vmatprep.subr.mxu0 0.0
    %1026 = vmatpush1.msra.mxu0 0.0
    %1027 = vmatprep.subr.mxu0 0.0
    %1028 = vmatpush1.msra.mxu0 0.0
    %1029 = vmatprep.mubr.f32.mxu0 0.0
    %1030 = vmatmul.mubr.f32.gmra.mrb[0].mxu0 %v923
    %v1031 = vpop.f32.mrb[0].mxu0
    %v1032 = vadd.f32 %v963, %v1031
    %v1033 = vpop.f32.mrb[0].mxu0
    %1034 = vdwg.mxu0
    %v1035 = vmax.f32 %v1032, 0.0
    %s1036 = scalar_lea.vmem [#allocation5], 832
    %v1037 = vld [vmem:[%s1036] sm:$0xf]
    %v1038 = vld [vmem:[%s1036 + $0x4] sm:$0xf]
    %v1039 = vld [vmem:[%s1036 + $0x8] sm:$0xf]
    %v1040 = vld [vmem:[%s1036 + $0xc] sm:$0xf]
    %v1041 = vld [vmem:[%s1036 + $0x10] sm:$0xf]
    %v1042 = vld [vmem:[%s1036 + $0x14] sm:$0xf]
    %v1043 = vld [vmem:[%s1036 + $0x18] sm:$0xf]
    %v1044 = vld [vmem:[%s1036 + $0x1c] sm:$0xf]
    %v1045 = vld [vmem:[%s1036 + $0x20] sm:$0xf]
    %v1046 = vld [vmem:[%s1036 + $0x24] sm:$0xf]
    %v1047 = vld [vmem:[%s1036 + $0x28] sm:$0xf]
    %v1048 = vld [vmem:[%s1036 + $0x2c] sm:$0xf]
    %v1049 = vld [vmem:[%s1036 + $0x30] sm:$0xf]
    %v1050 = vld [vmem:[%s1036 + $0x34] sm:$0xf]
    %v1051 = vld [vmem:[%s1036 + $0x38] sm:$0xf]
    %v1052 = vld [vmem:[%s1036 + $0x3c] sm:$0xf]
    %v1053 = vunpack.c.l.bf16 %v1037
    %v1054 = vunpack.c.l.bf16 %v1038
    %v1055 = vunpack.c.l.bf16 %v1039
    %v1056 = vunpack.c.l.bf16 %v1040
    %v1057 = vunpack.c.l.bf16 %v1041
    %v1058 = vunpack.c.l.bf16 %v1042
    %v1059 = vunpack.c.l.bf16 %v1043
    %v1060 = vunpack.c.l.bf16 %v1044
    %v1061 = vunpack.c.l.bf16 %v1045
    %v1062 = vunpack.c.l.bf16 %v1046
    %v1063 = vunpack.c.l.bf16 %v1047
    %v1064 = vunpack.c.l.bf16 %v1048
    %v1065 = vunpack.c.l.bf16 %v1049
    %v1066 = vunpack.c.l.bf16 %v1050
    %v1067 = vunpack.c.l.bf16 %v1051
    %v1068 = vunpack.c.l.bf16 %v1052
    %s1069 = scalar_lea.vmem [#allocation7], 13
    %v1070 = vld [vmem:[%s1069] sm:$0x1]
    %v1072 = vlaneseq
    %v1073 = vshrl.u32 %v1072, 7
    %v1074 = vsub.s32 0, %v1073
    %v1075 = vrot.slane %v1070, %v1074
    %1077 = vmatprep.subr.mxu0 0.0
    %1078 = vmatpush1.msra.mxu0 %v1053
    %1079 = vmatprep.subr.mxu0 0.0
    %1080 = vmatpush1.msra.mxu0 %v1054
    %1081 = vmatprep.subr.mxu0 0.0
    %1082 = vmatpush1.msra.mxu0 %v1055
    %1083 = vmatprep.subr.mxu0 0.0
    %1084 = vmatpush1.msra.mxu0 %v1056
    %1085 = vmatprep.subr.mxu0 0.0
    %1086 = vmatpush1.msra.mxu0 %v1057
    %1087 = vmatprep.subr.mxu0 0.0
    %1088 = vmatpush1.msra.mxu0 %v1058
    %1089 = vmatprep.subr.mxu0 0.0
    %1090 = vmatpush1.msra.mxu0 %v1059
    %1091 = vmatprep.subr.mxu0 0.0
    %1092 = vmatpush1.msra.mxu0 %v1060
    %1093 = vmatprep.subr.mxu0 0.0
    %1094 = vmatpush1.msra.mxu0 %v1061
    %1095 = vmatprep.subr.mxu0 0.0
    %1096 = vmatpush1.msra.mxu0 %v1062
    %1097 = vmatprep.subr.mxu0 0.0
    %1098 = vmatpush1.msra.mxu0 %v1063
    %1099 = vmatprep.subr.mxu0 0.0
    %1100 = vmatpush1.msra.mxu0 %v1064
    %1101 = vmatprep.subr.mxu0 0.0
    %1102 = vmatpush1.msra.mxu0 %v1065
    %1103 = vmatprep.subr.mxu0 0.0
    %1104 = vmatpush1.msra.mxu0 %v1066
    %1105 = vmatprep.subr.mxu0 0.0
    %1106 = vmatpush1.msra.mxu0 %v1067
    %1107 = vmatprep.subr.mxu0 0.0
    %1108 = vmatpush1.msra.mxu0 %v1068
    %1109 = vmatprep.subr.mxu0 0.0
    %1110 = vmatpush1.msra.mxu0 0.0
    %1111 = vmatprep.subr.mxu0 0.0
    %1112 = vmatpush1.msra.mxu0 0.0
    %1113 = vmatprep.subr.mxu0 0.0
    %1114 = vmatpush1.msra.mxu0 0.0
    %1115 = vmatprep.subr.mxu0 0.0
    %1116 = vmatpush1.msra.mxu0 0.0
    %1117 = vmatprep.subr.mxu0 0.0
    %1118 = vmatpush1.msra.mxu0 0.0
    %1119 = vmatprep.subr.mxu0 0.0
    %1120 = vmatpush1.msra.mxu0 0.0
    %1121 = vmatprep.subr.mxu0 0.0
    %1122 = vmatpush1.msra.mxu0 0.0
    %1123 = vmatprep.subr.mxu0 0.0
    %1124 = vmatpush1.msra.mxu0 0.0
    %1125 = vmatprep.subr.mxu0 0.0
    %1126 = vmatpush1.msra.mxu0 0.0
    %1127 = vmatprep.subr.mxu0 0.0
    %1128 = vmatpush1.msra.mxu0 0.0
    %1129 = vmatprep.subr.mxu0 0.0
    %1130 = vmatpush1.msra.mxu0 0.0
    %1131 = vmatprep.subr.mxu0 0.0
    %1132 = vmatpush1.msra.mxu0 0.0
    %1133 = vmatprep.subr.mxu0 0.0
    %1134 = vmatpush1.msra.mxu0 0.0
    %1135 = vmatprep.subr.mxu0 0.0
    %1136 = vmatpush1.msra.mxu0 0.0
    %1137 = vmatprep.subr.mxu0 0.0
    %1138 = vmatpush1.msra.mxu0 0.0
    %1139 = vmatprep.subr.mxu0 0.0
    %1140 = vmatpush1.msra.mxu0 0.0
    %1141 = vmatprep.mubr.f32.mxu0 0.0
    %1142 = vmatmul.mubr.f32.gmra.mrb[0].mxu0 %v1035
    %v1143 = vpop.f32.mrb[0].mxu0
    %v1144 = vadd.f32 %v1075, %v1143
    %v1145 = vpop.f32.mrb[0].mxu0
    %1146 = vdwg.mxu0
    %v1147 = vadd.f32 %v811, %v1144
    %s1148 = scalar_lea.vmem [#allocation5], 256
    %v1149 = vld [vmem:[%s1148] sm:$0xf]
    %v1150 = vld [vmem:[%s1148 + $0x4] sm:$0xf]
    %v1151 = vld [vmem:[%s1148 + $0x8] sm:$0xf]
    %v1152 = vld [vmem:[%s1148 + $0xc] sm:$0xf]
    %v1153 = vld [vmem:[%s1148 + $0x10] sm:$0xf]
    %v1154 = vld [vmem:[%s1148 + $0x14] sm:$0xf]
    %v1155 = vld [vmem:[%s1148 + $0x18] sm:$0xf]
    %v1156 = vld [vmem:[%s1148 + $0x1c] sm:$0xf]
    %v1157 = vld [vmem:[%s1148 + $0x20] sm:$0xf]
    %v1158 = vld [vmem:[%s1148 + $0x24] sm:$0xf]
    %v1159 = vld [vmem:[%s1148 + $0x28] sm:$0xf]
    %v1160 = vld [vmem:[%s1148 + $0x2c] sm:$0xf]
    %v1161 = vld [vmem:[%s1148 + $0x30] sm:$0xf]
    %v1162 = vld [vmem:[%s1148 + $0x34] sm:$0xf]
    %v1163 = vld [vmem:[%s1148 + $0x38] sm:$0xf]
    %v1164 = vld [vmem:[%s1148 + $0x3c] sm:$0xf]
    %v1165 = vunpack.c.l.bf16 %v1149
    %v1166 = vunpack.c.l.bf16 %v1150
    %v1167 = vunpack.c.l.bf16 %v1151
    %v1168 = vunpack.c.l.bf16 %v1152
    %v1169 = vunpack.c.l.bf16 %v1153
    %v1170 = vunpack.c.l.bf16 %v1154
    %v1171 = vunpack.c.l.bf16 %v1155
    %v1172 = vunpack.c.l.bf16 %v1156
    %v1173 = vunpack.c.l.bf16 %v1157
    %v1174 = vunpack.c.l.bf16 %v1158
    %v1175 = vunpack.c.l.bf16 %v1159
    %v1176 = vunpack.c.l.bf16 %v1160
    %v1177 = vunpack.c.l.bf16 %v1161
    %v1178 = vunpack.c.l.bf16 %v1162
    %v1179 = vunpack.c.l.bf16 %v1163
    %v1180 = vunpack.c.l.bf16 %v1164
    %s1181 = scalar_lea.vmem [#allocation7], 4
    %v1182 = vld [vmem:[%s1181] sm:$0x1]
    %v1184 = vlaneseq
    %v1185 = vshrl.u32 %v1184, 7
    %v1186 = vsub.s32 0, %v1185
    %v1187 = vrot.slane %v1182, %v1186
    %1189 = vmatprep.subr.mxu0 0.0
    %1190 = vmatpush1.msra.mxu0 %v1165
    %1191 = vmatprep.subr.mxu0 0.0
    %1192 = vmatpush1.msra.mxu0 %v1166
    %1193 = vmatprep.subr.mxu0 0.0
    %1194 = vmatpush1.msra.mxu0 %v1167
    %1195 = vmatprep.subr.mxu0 0.0
    %1196 = vmatpush1.msra.mxu0 %v1168
    %1197 = vmatprep.subr.mxu0 0.0
    %1198 = vmatpush1.msra.mxu0 %v1169
    %1199 = vmatprep.subr.mxu0 0.0
    %1200 = vmatpush1.msra.mxu0 %v1170
    %1201 = vmatprep.subr.mxu0 0.0
    %1202 = vmatpush1.msra.mxu0 %v1171
    %1203 = vmatprep.subr.mxu0 0.0
    %1204 = vmatpush1.msra.mxu0 %v1172
    %1205 = vmatprep.subr.mxu0 0.0
    %1206 = vmatpush1.msra.mxu0 %v1173
    %1207 = vmatprep.subr.mxu0 0.0
    %1208 = vmatpush1.msra.mxu0 %v1174
    %1209 = vmatprep.subr.mxu0 0.0
    %1210 = vmatpush1.msra.mxu0 %v1175
    %1211 = vmatprep.subr.mxu0 0.0
    %1212 = vmatpush1.msra.mxu0 %v1176
    %1213 = vmatprep.subr.mxu0 0.0
    %1214 = vmatpush1.msra.mxu0 %v1177
    %1215 = vmatprep.subr.mxu0 0.0
    %1216 = vmatpush1.msra.mxu0 %v1178
    %1217 = vmatprep.subr.mxu0 0.0
    %1218 = vmatpush1.msra.mxu0 %v1179
    %1219 = vmatprep.subr.mxu0 0.0
    %1220 = vmatpush1.msra.mxu0 %v1180
    %1221 = vmatprep.subr.mxu0 0.0
    %1222 = vmatpush1.msra.mxu0 0.0
    %1223 = vmatprep.subr.mxu0 0.0
    %1224 = vmatpush1.msra.mxu0 0.0
    %1225 = vmatprep.subr.mxu0 0.0
    %1226 = vmatpush1.msra.mxu0 0.0
    %1227 = vmatprep.subr.mxu0 0.0
    %1228 = vmatpush1.msra.mxu0 0.0
    %1229 = vmatprep.subr.mxu0 0.0
    %1230 = vmatpush1.msra.mxu0 0.0
    %1231 = vmatprep.subr.mxu0 0.0
    %1232 = vmatpush1.msra.mxu0 0.0
    %1233 = vmatprep.subr.mxu0 0.0
    %1234 = vmatpush1.msra.mxu0 0.0
    %1235 = vmatprep.subr.mxu0 0.0
    %1236 = vmatpush1.msra.mxu0 0.0
    %1237 = vmatprep.subr.mxu0 0.0
    %1238 = vmatpush1.msra.mxu0 0.0
    %1239 = vmatprep.subr.mxu0 0.0
    %1240 = vmatpush1.msra.mxu0 0.0
    %1241 = vmatprep.subr.mxu0 0.0
    %1242 = vmatpush1.msra.mxu0 0.0
    %1243 = vmatprep.subr.mxu0 0.0
    %1244 = vmatpush1.msra.mxu0 0.0
    %1245 = vmatprep.subr.mxu0 0.0
    %1246 = vmatpush1.msra.mxu0 0.0
    %1247 = vmatprep.subr.mxu0 0.0
    %1248 = vmatpush1.msra.mxu0 0.0
    %1249 = vmatprep.subr.mxu0 0.0
    %1250 = vmatpush1.msra.mxu0 0.0
    %1251 = vmatprep.subr.mxu0 0.0
    %1252 = vmatpush1.msra.mxu0 0.0
    %1253 = vmatprep.mubr.f32.mxu0 0.0
    %1254 = vmatmul.mubr.f32.gmra.mrb[0].mxu0 %v1147
    %v1255 = vpop.f32.mrb[0].mxu0
    %v1256 = vadd.f32 %v1187, %v1255
    %v1257 = vpop.f32.mrb[0].mxu0
    %1258 = vdwg.mxu0
    %v1259 = vmax.f32 %v1256, 0.0
    %s1260 = scalar_lea.vmem [#allocation5], 576
    %v1261 = vld [vmem:[%s1260] sm:$0xf]
    %v1262 = vld [vmem:[%s1260 + $0x4] sm:$0xf]
    %v1263 = vld [vmem:[%s1260 + $0x8] sm:$0xf]
    %v1264 = vld [vmem:[%s1260 + $0xc] sm:$0xf]
    %v1265 = vld [vmem:[%s1260 + $0x10] sm:$0xf]
    %v1266 = vld [vmem:[%s1260 + $0x14] sm:$0xf]
    %v1267 = vld [vmem:[%s1260 + $0x18] sm:$0xf]
    %v1268 = vld [vmem:[%s1260 + $0x1c] sm:$0xf]
    %v1269 = vld [vmem:[%s1260 + $0x20] sm:$0xf]
    %v1270 = vld [vmem:[%s1260 + $0x24] sm:$0xf]
    %v1271 = vld [vmem:[%s1260 + $0x28] sm:$0xf]
    %v1272 = vld [vmem:[%s1260 + $0x2c] sm:$0xf]
    %v1273 = vld [vmem:[%s1260 + $0x30] sm:$0xf]
    %v1274 = vld [vmem:[%s1260 + $0x34] sm:$0xf]
    %v1275 = vld [vmem:[%s1260 + $0x38] sm:$0xf]
    %v1276 = vld [vmem:[%s1260 + $0x3c] sm:$0xf]
    %v1277 = vunpack.c.l.bf16 %v1261
    %v1278 = vunpack.c.l.bf16 %v1262
    %v1279 = vunpack.c.l.bf16 %v1263
    %v1280 = vunpack.c.l.bf16 %v1264
    %v1281 = vunpack.c.l.bf16 %v1265
    %v1282 = vunpack.c.l.bf16 %v1266
    %v1283 = vunpack.c.l.bf16 %v1267
    %v1284 = vunpack.c.l.bf16 %v1268
    %v1285 = vunpack.c.l.bf16 %v1269
    %v1286 = vunpack.c.l.bf16 %v1270
    %v1287 = vunpack.c.l.bf16 %v1271
    %v1288 = vunpack.c.l.bf16 %v1272
    %v1289 = vunpack.c.l.bf16 %v1273
    %v1290 = vunpack.c.l.bf16 %v1274
    %v1291 = vunpack.c.l.bf16 %v1275
    %v1292 = vunpack.c.l.bf16 %v1276
    %s1293 = scalar_lea.vmem [#allocation7], 9
    %v1294 = vld [vmem:[%s1293] sm:$0x1]
    %v1296 = vlaneseq
    %v1297 = vshrl.u32 %v1296, 7
    %v1298 = vsub.s32 0, %v1297
    %v1299 = vrot.slane %v1294, %v1298
    %1301 = vmatprep.subr.mxu0 0.0
    %1302 = vmatpush1.msra.mxu0 %v1277
    %1303 = vmatprep.subr.mxu0 0.0
    %1304 = vmatpush1.msra.mxu0 %v1278
    %1305 = vmatprep.subr.mxu0 0.0
    %1306 = vmatpush1.msra.mxu0 %v1279
    %1307 = vmatprep.subr.mxu0 0.0
    %1308 = vmatpush1.msra.mxu0 %v1280
    %1309 = vmatprep.subr.mxu0 0.0
    %1310 = vmatpush1.msra.mxu0 %v1281
    %1311 = vmatprep.subr.mxu0 0.0
    %1312 = vmatpush1.msra.mxu0 %v1282
    %1313 = vmatprep.subr.mxu0 0.0
    %1314 = vmatpush1.msra.mxu0 %v1283
    %1315 = vmatprep.subr.mxu0 0.0
    %1316 = vmatpush1.msra.mxu0 %v1284
    %1317 = vmatprep.subr.mxu0 0.0
    %1318 = vmatpush1.msra.mxu0 %v1285
    %1319 = vmatprep.subr.mxu0 0.0
    %1320 = vmatpush1.msra.mxu0 %v1286
    %1321 = vmatprep.subr.mxu0 0.0
    %1322 = vmatpush1.msra.mxu0 %v1287
    %1323 = vmatprep.subr.mxu0 0.0
    %1324 = vmatpush1.msra.mxu0 %v1288
    %1325 = vmatprep.subr.mxu0 0.0
    %1326 = vmatpush1.msra.mxu0 %v1289
    %1327 = vmatprep.subr.mxu0 0.0
    %1328 = vmatpush1.msra.mxu0 %v1290
    %1329 = vmatprep.subr.mxu0 0.0
    %1330 = vmatpush1.msra.mxu0 %v1291
    %1331 = vmatprep.subr.mxu0 0.0
    %1332 = vmatpush1.msra.mxu0 %v1292
    %1333 = vmatprep.subr.mxu0 0.0
    %1334 = vmatpush1.msra.mxu0 0.0
    %1335 = vmatprep.subr.mxu0 0.0
    %1336 = vmatpush1.msra.mxu0 0.0
    %1337 = vmatprep.subr.mxu0 0.0
    %1338 = vmatpush1.msra.mxu0 0.0
    %1339 = vmatprep.subr.mxu0 0.0
    %1340 = vmatpush1.msra.mxu0 0.0
    %1341 = vmatprep.subr.mxu0 0.0
    %1342 = vmatpush1.msra.mxu0 0.0
    %1343 = vmatprep.subr.mxu0 0.0
    %1344 = vmatpush1.msra.mxu0 0.0
    %1345 = vmatprep.subr.mxu0 0.0
    %1346 = vmatpush1.msra.mxu0 0.0
    %1347 = vmatprep.subr.mxu0 0.0
    %1348 = vmatpush1.msra.mxu0 0.0
    %1349 = vmatprep.subr.mxu0 0.0
    %1350 = vmatpush1.msra.mxu0 0.0
    %1351 = vmatprep.subr.mxu0 0.0
    %1352 = vmatpush1.msra.mxu0 0.0
    %1353 = vmatprep.subr.mxu0 0.0
    %1354 = vmatpush1.msra.mxu0 0.0
    %1355 = vmatprep.subr.mxu0 0.0
    %1356 = vmatpush1.msra.mxu0 0.0
    %1357 = vmatprep.subr.mxu0 0.0
    %1358 = vmatpush1.msra.mxu0 0.0
    %1359 = vmatprep.subr.mxu0 0.0
    %1360 = vmatpush1.msra.mxu0 0.0
    %1361 = vmatprep.subr.mxu0 0.0
    %1362 = vmatpush1.msra.mxu0 0.0
    %1363 = vmatprep.subr.mxu0 0.0
    %1364 = vmatpush1.msra.mxu0 0.0
    %1365 = vmatprep.mubr.f32.mxu0 0.0
    %1366 = vmatmul.mubr.f32.gmra.mrb[0].mxu0 %v1259
    %v1367 = vpop.f32.mrb[0].mxu0
    %v1368 = vadd.f32 %v1299, %v1367
    %v1369 = vpop.f32.mrb[0].mxu0
    %1370 = vdwg.mxu0
    %v1371 = vmax.f32 %v1368, 0.0
    %s1372 = scalar_lea.vmem [#allocation5], 896
    %v1373 = vld [vmem:[%s1372] sm:$0xf]
    %v1374 = vld [vmem:[%s1372 + $0x4] sm:$0xf]
    %v1375 = vld [vmem:[%s1372 + $0x8] sm:$0xf]
    %v1376 = vld [vmem:[%s1372 + $0xc] sm:$0xf]
    %v1377 = vld [vmem:[%s1372 + $0x10] sm:$0xf]
    %v1378 = vld [vmem:[%s1372 + $0x14] sm:$0xf]
    %v1379 = vld [vmem:[%s1372 + $0x18] sm:$0xf]
    %v1380 = vld [vmem:[%s1372 + $0x1c] sm:$0xf]
    %v1381 = vld [vmem:[%s1372 + $0x20] sm:$0xf]
    %v1382 = vld [vmem:[%s1372 + $0x24] sm:$0xf]
    %v1383 = vld [vmem:[%s1372 + $0x28] sm:$0xf]
    %v1384 = vld [vmem:[%s1372 + $0x2c] sm:$0xf]
    %v1385 = vld [vmem:[%s1372 + $0x30] sm:$0xf]
    %v1386 = vld [vmem:[%s1372 + $0x34] sm:$0xf]
    %v1387 = vld [vmem:[%s1372 + $0x38] sm:$0xf]
    %v1388 = vld [vmem:[%s1372 + $0x3c] sm:$0xf]
    %v1389 = vunpack.c.l.bf16 %v1373
    %v1390 = vunpack.c.l.bf16 %v1374
    %v1391 = vunpack.c.l.bf16 %v1375
    %v1392 = vunpack.c.l.bf16 %v1376
    %v1393 = vunpack.c.l.bf16 %v1377
    %v1394 = vunpack.c.l.bf16 %v1378
    %v1395 = vunpack.c.l.bf16 %v1379
    %v1396 = vunpack.c.l.bf16 %v1380
    %v1397 = vunpack.c.l.bf16 %v1381
    %v1398 = vunpack.c.l.bf16 %v1382
    %v1399 = vunpack.c.l.bf16 %v1383
    %v1400 = vunpack.c.l.bf16 %v1384
    %v1401 = vunpack.c.l.bf16 %v1385
    %v1402 = vunpack.c.l.bf16 %v1386
    %v1403 = vunpack.c.l.bf16 %v1387
    %v1404 = vunpack.c.l.bf16 %v1388
    %s1405 = scalar_lea.vmem [#allocation7], 14
    %v1406 = vld [vmem:[%s1405] sm:$0x1]
    %v1408 = vlaneseq
    %v1409 = vshrl.u32 %v1408, 7
    %v1410 = vsub.s32 0, %v1409
    %v1411 = vrot.slane %v1406, %v1410
    %1413 = vmatprep.subr.mxu0 0.0
    %1414 = vmatpush1.msra.mxu0 %v1389
    %1415 = vmatprep.subr.mxu0 0.0
    %1416 = vmatpush1.msra.mxu0 %v1390
    %1417 = vmatprep.subr.mxu0 0.0
    %1418 = vmatpush1.msra.mxu0 %v1391
    %1419 = vmatprep.subr.mxu0 0.0
    %1420 = vmatpush1.msra.mxu0 %v1392
    %1421 = vmatprep.subr.mxu0 0.0
    %1422 = vmatpush1.msra.mxu0 %v1393
    %1423 = vmatprep.subr.mxu0 0.0
    %1424 = vmatpush1.msra.mxu0 %v1394
    %1425 = vmatprep.subr.mxu0 0.0
    %1426 = vmatpush1.msra.mxu0 %v1395
    %1427 = vmatprep.subr.mxu0 0.0
    %1428 = vmatpush1.msra.mxu0 %v1396
    %1429 = vmatprep.subr.mxu0 0.0
    %1430 = vmatpush1.msra.mxu0 %v1397
    %1431 = vmatprep.subr.mxu0 0.0
    %1432 = vmatpush1.msra.mxu0 %v1398
    %1433 = vmatprep.subr.mxu0 0.0
    %1434 = vmatpush1.msra.mxu0 %v1399
    %1435 = vmatprep.subr.mxu0 0.0
    %1436 = vmatpush1.msra.mxu0 %v1400
    %1437 = vmatprep.subr.mxu0 0.0
    %1438 = vmatpush1.msra.mxu0 %v1401
    %1439 = vmatprep.subr.mxu0 0.0
    %1440 = vmatpush1.msra.mxu0 %v1402
    %1441 = vmatprep.subr.mxu0 0.0
    %1442 = vmatpush1.msra.mxu0 %v1403
    %1443 = vmatprep.subr.mxu0 0.0
    %1444 = vmatpush1.msra.mxu0 %v1404
    %1445 = vmatprep.subr.mxu0 0.0
    %1446 = vmatpush1.msra.mxu0 0.0
    %1447 = vmatprep.subr.mxu0 0.0
    %1448 = vmatpush1.msra.mxu0 0.0
    %1449 = vmatprep.subr.mxu0 0.0
    %1450 = vmatpush1.msra.mxu0 0.0
    %1451 = vmatprep.subr.mxu0 0.0
    %1452 = vmatpush1.msra.mxu0 0.0
    %1453 = vmatprep.subr.mxu0 0.0
    %1454 = vmatpush1.msra.mxu0 0.0
    %1455 = vmatprep.subr.mxu0 0.0
    %1456 = vmatpush1.msra.mxu0 0.0
    %1457 = vmatprep.subr.mxu0 0.0
    %1458 = vmatpush1.msra.mxu0 0.0
    %1459 = vmatprep.subr.mxu0 0.0
    %1460 = vmatpush1.msra.mxu0 0.0
    %1461 = vmatprep.subr.mxu0 0.0
    %1462 = vmatpush1.msra.mxu0 0.0
    %1463 = vmatprep.subr.mxu0 0.0
    %1464 = vmatpush1.msra.mxu0 0.0
    %1465 = vmatprep.subr.mxu0 0.0
    %1466 = vmatpush1.msra.mxu0 0.0
    %1467 = vmatprep.subr.mxu0 0.0
    %1468 = vmatpush1.msra.mxu0 0.0
    %1469 = vmatprep.subr.mxu0 0.0
    %1470 = vmatpush1.msra.mxu0 0.0
    %1471 = vmatprep.subr.mxu0 0.0
    %1472 = vmatpush1.msra.mxu0 0.0
    %1473 = vmatprep.subr.mxu0 0.0
    %1474 = vmatpush1.msra.mxu0 0.0
    %1475 = vmatprep.subr.mxu0 0.0
    %1476 = vmatpush1.msra.mxu0 0.0
    %1477 = vmatprep.mubr.f32.mxu0 0.0
    %1478 = vmatmul.mubr.f32.gmra.mrb[0].mxu0 %v1371
    %v1479 = vpop.f32.mrb[0].mxu0
    %v1480 = vadd.f32 %v1411, %v1479
    %v1481 = vpop.f32.mrb[0].mxu0
    %1482 = vdwg.mxu0
    %v1483 = vadd.f32 %v1147, %v1480
    %s1484 = scalar_lea.vmem [#allocation5], 320
    %v1485 = vld [vmem:[%s1484] sm:$0xf]
    %v1486 = vld [vmem:[%s1484 + $0x4] sm:$0xf]
    %v1487 = vld [vmem:[%s1484 + $0x8] sm:$0xf]
    %v1488 = vld [vmem:[%s1484 + $0xc] sm:$0xf]
    %v1489 = vld [vmem:[%s1484 + $0x10] sm:$0xf]
    %v1490 = vld [vmem:[%s1484 + $0x14] sm:$0xf]
    %v1491 = vld [vmem:[%s1484 + $0x18] sm:$0xf]
    %v1492 = vld [vmem:[%s1484 + $0x1c] sm:$0xf]
    %v1493 = vld [vmem:[%s1484 + $0x20] sm:$0xf]
    %v1494 = vld [vmem:[%s1484 + $0x24] sm:$0xf]
    %v1495 = vld [vmem:[%s1484 + $0x28] sm:$0xf]
    %v1496 = vld [vmem:[%s1484 + $0x2c] sm:$0xf]
    %v1497 = vld [vmem:[%s1484 + $0x30] sm:$0xf]
    %v1498 = vld [vmem:[%s1484 + $0x34] sm:$0xf]
    %v1499 = vld [vmem:[%s1484 + $0x38] sm:$0xf]
    %v1500 = vld [vmem:[%s1484 + $0x3c] sm:$0xf]
    %v1501 = vunpack.c.l.bf16 %v1485
    %v1502 = vunpack.c.l.bf16 %v1486
    %v1503 = vunpack.c.l.bf16 %v1487
    %v1504 = vunpack.c.l.bf16 %v1488
    %v1505 = vunpack.c.l.bf16 %v1489
    %v1506 = vunpack.c.l.bf16 %v1490
    %v1507 = vunpack.c.l.bf16 %v1491
    %v1508 = vunpack.c.l.bf16 %v1492
    %v1509 = vunpack.c.l.bf16 %v1493
    %v1510 = vunpack.c.l.bf16 %v1494
    %v1511 = vunpack.c.l.bf16 %v1495
    %v1512 = vunpack.c.l.bf16 %v1496
    %v1513 = vunpack.c.l.bf16 %v1497
    %v1514 = vunpack.c.l.bf16 %v1498
    %v1515 = vunpack.c.l.bf16 %v1499
    %v1516 = vunpack.c.l.bf16 %v1500
    %s1517 = scalar_lea.vmem [#allocation7], 5
    %v1518 = vld [vmem:[%s1517] sm:$0x1]
    %v1520 = vlaneseq
    %v1521 = vshrl.u32 %v1520, 7
    %v1522 = vsub.s32 0, %v1521
    %v1523 = vrot.slane %v1518, %v1522
    %1525 = vmatprep.subr.mxu0 0.0
    %1526 = vmatpush1.msra.mxu0 %v1501
    %1527 = vmatprep.subr.mxu0 0.0
    %1528 = vmatpush1.msra.mxu0 %v1502
    %1529 = vmatprep.subr.mxu0 0.0
    %1530 = vmatpush1.msra.mxu0 %v1503
    %1531 = vmatprep.subr.mxu0 0.0
    %1532 = vmatpush1.msra.mxu0 %v1504
    %1533 = vmatprep.subr.mxu0 0.0
    %1534 = vmatpush1.msra.mxu0 %v1505
    %1535 = vmatprep.subr.mxu0 0.0
    %1536 = vmatpush1.msra.mxu0 %v1506
    %1537 = vmatprep.subr.mxu0 0.0
    %1538 = vmatpush1.msra.mxu0 %v1507
    %1539 = vmatprep.subr.mxu0 0.0
    %1540 = vmatpush1.msra.mxu0 %v1508
    %1541 = vmatprep.subr.mxu0 0.0
    %1542 = vmatpush1.msra.mxu0 %v1509
    %1543 = vmatprep.subr.mxu0 0.0
    %1544 = vmatpush1.msra.mxu0 %v1510
    %1545 = vmatprep.subr.mxu0 0.0
    %1546 = vmatpush1.msra.mxu0 %v1511
    %1547 = vmatprep.subr.mxu0 0.0
    %1548 = vmatpush1.msra.mxu0 %v1512
    %1549 = vmatprep.subr.mxu0 0.0
    %1550 = vmatpush1.msra.mxu0 %v1513
    %1551 = vmatprep.subr.mxu0 0.0
    %1552 = vmatpush1.msra.mxu0 %v1514
    %1553 = vmatprep.subr.mxu0 0.0
    %1554 = vmatpush1.msra.mxu0 %v1515
    %1555 = vmatprep.subr.mxu0 0.0
    %1556 = vmatpush1.msra.mxu0 %v1516
    %1557 = vmatprep.subr.mxu0 0.0
    %1558 = vmatpush1.msra.mxu0 0.0
    %1559 = vmatprep.subr.mxu0 0.0
    %1560 = vmatpush1.msra.mxu0 0.0
    %1561 = vmatprep.subr.mxu0 0.0
    %1562 = vmatpush1.msra.mxu0 0.0
    %1563 = vmatprep.subr.mxu0 0.0
    %1564 = vmatpush1.msra.mxu0 0.0
    %1565 = vmatprep.subr.mxu0 0.0
    %1566 = vmatpush1.msra.mxu0 0.0
    %1567 = vmatprep.subr.mxu0 0.0
    %1568 = vmatpush1.msra.mxu0 0.0
    %1569 = vmatprep.subr.mxu0 0.0
    %1570 = vmatpush1.msra.mxu0 0.0
    %1571 = vmatprep.subr.mxu0 0.0
    %1572 = vmatpush1.msra.mxu0 0.0
    %1573 = vmatprep.subr.mxu0 0.0
    %1574 = vmatpush1.msra.mxu0 0.0
    %1575 = vmatprep.subr.mxu0 0.0
    %1576 = vmatpush1.msra.mxu0 0.0
    %1577 = vmatprep.subr.mxu0 0.0
    %1578 = vmatpush1.msra.mxu0 0.0
    %1579 = vmatprep.subr.mxu0 0.0
    %1580 = vmatpush1.msra.mxu0 0.0
    %1581 = vmatprep.subr.mxu0 0.0
    %1582 = vmatpush1.msra.mxu0 0.0
    %1583 = vmatprep.subr.mxu0 0.0
    %1584 = vmatpush1.msra.mxu0 0.0
    %1585 = vmatprep.subr.mxu0 0.0
    %1586 = vmatpush1.msra.mxu0 0.0
    %1587 = vmatprep.subr.mxu0 0.0
    %1588 = vmatpush1.msra.mxu0 0.0
    %1589 = vmatprep.mubr.f32.mxu0 0.0
    %1590 = vmatmul.mubr.f32.gmra.mrb[0].mxu0 %v1483
    %v1591 = vpop.f32.mrb[0].mxu0
    %v1592 = vadd.f32 %v1523, %v1591
    %v1593 = vpop.f32.mrb[0].mxu0
    %1594 = vdwg.mxu0
    %v1595 = vmax.f32 %v1592, 0.0
    %s1596 = scalar_lea.vmem [#allocation5], 640
    %v1597 = vld [vmem:[%s1596] sm:$0xf]
    %v1598 = vld [vmem:[%s1596 + $0x4] sm:$0xf]
    %v1599 = vld [vmem:[%s1596 + $0x8] sm:$0xf]
    %v1600 = vld [vmem:[%s1596 + $0xc] sm:$0xf]
    %v1601 = vld [vmem:[%s1596 + $0x10] sm:$0xf]
    %v1602 = vld [vmem:[%s1596 + $0x14] sm:$0xf]
    %v1603 = vld [vmem:[%s1596 + $0x18] sm:$0xf]
    %v1604 = vld [vmem:[%s1596 + $0x1c] sm:$0xf]
    %v1605 = vld [vmem:[%s1596 + $0x20] sm:$0xf]
    %v1606 = vld [vmem:[%s1596 + $0x24] sm:$0xf]
    %v1607 = vld [vmem:[%s1596 + $0x28] sm:$0xf]
    %v1608 = vld [vmem:[%s1596 + $0x2c] sm:$0xf]
    %v1609 = vld [vmem:[%s1596 + $0x30] sm:$0xf]
    %v1610 = vld [vmem:[%s1596 + $0x34] sm:$0xf]
    %v1611 = vld [vmem:[%s1596 + $0x38] sm:$0xf]
    %v1612 = vld [vmem:[%s1596 + $0x3c] sm:$0xf]
    %v1613 = vunpack.c.l.bf16 %v1597
    %v1614 = vunpack.c.l.bf16 %v1598
    %v1615 = vunpack.c.l.bf16 %v1599
    %v1616 = vunpack.c.l.bf16 %v1600
    %v1617 = vunpack.c.l.bf16 %v1601
    %v1618 = vunpack.c.l.bf16 %v1602
    %v1619 = vunpack.c.l.bf16 %v1603
    %v1620 = vunpack.c.l.bf16 %v1604
    %v1621 = vunpack.c.l.bf16 %v1605
    %v1622 = vunpack.c.l.bf16 %v1606
    %v1623 = vunpack.c.l.bf16 %v1607
    %v1624 = vunpack.c.l.bf16 %v1608
    %v1625 = vunpack.c.l.bf16 %v1609
    %v1626 = vunpack.c.l.bf16 %v1610
    %v1627 = vunpack.c.l.bf16 %v1611
    %v1628 = vunpack.c.l.bf16 %v1612
    %s1629 = scalar_lea.vmem [#allocation7], 10
    %v1630 = vld [vmem:[%s1629] sm:$0x1]
    %v1632 = vlaneseq
    %v1633 = vshrl.u32 %v1632, 7
    %v1634 = vsub.s32 0, %v1633
    %v1635 = vrot.slane %v1630, %v1634
    %1637 = vmatprep.subr.mxu0 0.0
    %1638 = vmatpush1.msra.mxu0 %v1613
    %1639 = vmatprep.subr.mxu0 0.0
    %1640 = vmatpush1.msra.mxu0 %v1614
    %1641 = vmatprep.subr.mxu0 0.0
    %1642 = vmatpush1.msra.mxu0 %v1615
    %1643 = vmatprep.subr.mxu0 0.0
    %1644 = vmatpush1.msra.mxu0 %v1616
    %1645 = vmatprep.subr.mxu0 0.0
    %1646 = vmatpush1.msra.mxu0 %v1617
    %1647 = vmatprep.subr.mxu0 0.0
    %1648 = vmatpush1.msra.mxu0 %v1618
    %1649 = vmatprep.subr.mxu0 0.0
    %1650 = vmatpush1.msra.mxu0 %v1619
    %1651 = vmatprep.subr.mxu0 0.0
    %1652 = vmatpush1.msra.mxu0 %v1620
    %1653 = vmatprep.subr.mxu0 0.0
    %1654 = vmatpush1.msra.mxu0 %v1621
    %1655 = vmatprep.subr.mxu0 0.0
    %1656 = vmatpush1.msra.mxu0 %v1622
    %1657 = vmatprep.subr.mxu0 0.0
    %1658 = vmatpush1.msra.mxu0 %v1623
    %1659 = vmatprep.subr.mxu0 0.0
    %1660 = vmatpush1.msra.mxu0 %v1624
    %1661 = vmatprep.subr.mxu0 0.0
    %1662 = vmatpush1.msra.mxu0 %v1625
    %1663 = vmatprep.subr.mxu0 0.0
    %1664 = vmatpush1.msra.mxu0 %v1626
    %1665 = vmatprep.subr.mxu0 0.0
    %1666 = vmatpush1.msra.mxu0 %v1627
    %1667 = vmatprep.subr.mxu0 0.0
    %1668 = vmatpush1.msra.mxu0 %v1628
    %1669 = vmatprep.subr.mxu0 0.0
    %1670 = vmatpush1.msra.mxu0 0.0
    %1671 = vmatprep.subr.mxu0 0.0
    %1672 = vmatpush1.msra.mxu0 0.0
    %1673 = vmatprep.subr.mxu0 0.0
    %1674 = vmatpush1.msra.mxu0 0.0
    %1675 = vmatprep.subr.mxu0 0.0
    %1676 = vmatpush1.msra.mxu0 0.0
    %1677 = vmatprep.subr.mxu0 0.0
    %1678 = vmatpush1.msra.mxu0 0.0
    %1679 = vmatprep.subr.mxu0 0.0
    %1680 = vmatpush1.msra.mxu0 0.0
    %1681 = vmatprep.subr.mxu0 0.0
    %1682 = vmatpush1.msra.mxu0 0.0
    %1683 = vmatprep.subr.mxu0 0.0
    %1684 = vmatpush1.msra.mxu0 0.0
    %1685 = vmatprep.subr.mxu0 0.0
    %1686 = vmatpush1.msra.mxu0 0.0
    %1687 = vmatprep.subr.mxu0 0.0
    %1688 = vmatpush1.msra.mxu0 0.0
    %1689 = vmatprep.subr.mxu0 0.0
    %1690 = vmatpush1.msra.mxu0 0.0
    %1691 = vmatprep.subr.mxu0 0.0
    %1692 = vmatpush1.msra.mxu0 0.0
    %1693 = vmatprep.subr.mxu0 0.0
    %1694 = vmatpush1.msra.mxu0 0.0
    %1695 = vmatprep.subr.mxu0 0.0
    %1696 = vmatpush1.msra.mxu0 0.0
    %1697 = vmatprep.subr.mxu0 0.0
    %1698 = vmatpush1.msra.mxu0 0.0
    %1699 = vmatprep.subr.mxu0 0.0
    %1700 = vmatpush1.msra.mxu0 0.0
    %1701 = vmatprep.mubr.f32.mxu0 0.0
    %1702 = vmatmul.mubr.f32.gmra.mrb[0].mxu0 %v1595
    %v1703 = vpop.f32.mrb[0].mxu0
    %v1704 = vadd.f32 %v1635, %v1703
    %v1705 = vpop.f32.mrb[0].mxu0
    %1706 = vdwg.mxu0
    %v1707 = vmax.f32 %v1704, 0.0
    %s1708 = scalar_lea.vmem [#allocation5], 960
    %v1709 = vld [vmem:[%s1708] sm:$0xf]
    %v1710 = vld [vmem:[%s1708 + $0x4] sm:$0xf]
    %v1711 = vld [vmem:[%s1708 + $0x8] sm:$0xf]
    %v1712 = vld [vmem:[%s1708 + $0xc] sm:$0xf]
    %v1713 = vld [vmem:[%s1708 + $0x10] sm:$0xf]
    %v1714 = vld [vmem:[%s1708 + $0x14] sm:$0xf]
    %v1715 = vld [vmem:[%s1708 + $0x18] sm:$0xf]
    %v1716 = vld [vmem:[%s1708 + $0x1c] sm:$0xf]
    %v1717 = vld [vmem:[%s1708 + $0x20] sm:$0xf]
    %v1718 = vld [vmem:[%s1708 + $0x24] sm:$0xf]
    %v1719 = vld [vmem:[%s1708 + $0x28] sm:$0xf]
    %v1720 = vld [vmem:[%s1708 + $0x2c] sm:$0xf]
    %v1721 = vld [vmem:[%s1708 + $0x30] sm:$0xf]
    %v1722 = vld [vmem:[%s1708 + $0x34] sm:$0xf]
    %v1723 = vld [vmem:[%s1708 + $0x38] sm:$0xf]
    %v1724 = vld [vmem:[%s1708 + $0x3c] sm:$0xf]
    %v1725 = vunpack.c.l.bf16 %v1709
    %v1726 = vunpack.c.l.bf16 %v1710
    %v1727 = vunpack.c.l.bf16 %v1711
    %v1728 = vunpack.c.l.bf16 %v1712
    %v1729 = vunpack.c.l.bf16 %v1713
    %v1730 = vunpack.c.l.bf16 %v1714
    %v1731 = vunpack.c.l.bf16 %v1715
    %v1732 = vunpack.c.l.bf16 %v1716
    %v1733 = vunpack.c.l.bf16 %v1717
    %v1734 = vunpack.c.l.bf16 %v1718
    %v1735 = vunpack.c.l.bf16 %v1719
    %v1736 = vunpack.c.l.bf16 %v1720
    %v1737 = vunpack.c.l.bf16 %v1721
    %v1738 = vunpack.c.l.bf16 %v1722
    %v1739 = vunpack.c.l.bf16 %v1723
    %v1740 = vunpack.c.l.bf16 %v1724
    %s1741 = scalar_lea.vmem [#allocation7], 15
    %v1742 = vld [vmem:[%s1741] sm:$0x1]
    %v1744 = vlaneseq
    %v1745 = vshrl.u32 %v1744, 7
    %v1746 = vsub.s32 0, %v1745
    %v1747 = vrot.slane %v1742, %v1746
    %1749 = vmatprep.subr.mxu0 0.0
    %1750 = vmatpush1.msra.mxu0 %v1725
    %1751 = vmatprep.subr.mxu0 0.0
    %1752 = vmatpush1.msra.mxu0 %v1726
    %1753 = vmatprep.subr.mxu0 0.0
    %1754 = vmatpush1.msra.mxu0 %v1727
    %1755 = vmatprep.subr.mxu0 0.0
    %1756 = vmatpush1.msra.mxu0 %v1728
    %1757 = vmatprep.subr.mxu0 0.0
    %1758 = vmatpush1.msra.mxu0 %v1729
    %1759 = vmatprep.subr.mxu0 0.0
    %1760 = vmatpush1.msra.mxu0 %v1730
    %1761 = vmatprep.subr.mxu0 0.0
    %1762 = vmatpush1.msra.mxu0 %v1731
    %1763 = vmatprep.subr.mxu0 0.0
    %1764 = vmatpush1.msra.mxu0 %v1732
    %1765 = vmatprep.subr.mxu0 0.0
    %1766 = vmatpush1.msra.mxu0 %v1733
    %1767 = vmatprep.subr.mxu0 0.0
    %1768 = vmatpush1.msra.mxu0 %v1734
    %1769 = vmatprep.subr.mxu0 0.0
    %1770 = vmatpush1.msra.mxu0 %v1735
    %1771 = vmatprep.subr.mxu0 0.0
    %1772 = vmatpush1.msra.mxu0 %v1736
    %1773 = vmatprep.subr.mxu0 0.0
    %1774 = vmatpush1.msra.mxu0 %v1737
    %1775 = vmatprep.subr.mxu0 0.0
    %1776 = vmatpush1.msra.mxu0 %v1738
    %1777 = vmatprep.subr.mxu0 0.0
    %1778 = vmatpush1.msra.mxu0 %v1739
    %1779 = vmatprep.subr.mxu0 0.0
    %1780 = vmatpush1.msra.mxu0 %v1740
    %1781 = vmatprep.subr.mxu0 0.0
    %1782 = vmatpush1.msra.mxu0 0.0
    %1783 = vmatprep.subr.mxu0 0.0
    %1784 = vmatpush1.msra.mxu0 0.0
    %1785 = vmatprep.subr.mxu0 0.0
    %1786 = vmatpush1.msra.mxu0 0.0
    %1787 = vmatprep.subr.mxu0 0.0
    %1788 = vmatpush1.msra.mxu0 0.0
    %1789 = vmatprep.subr.mxu0 0.0
    %1790 = vmatpush1.msra.mxu0 0.0
    %1791 = vmatprep.subr.mxu0 0.0
    %1792 = vmatpush1.msra.mxu0 0.0
    %1793 = vmatprep.subr.mxu0 0.0
    %1794 = vmatpush1.msra.mxu0 0.0
    %1795 = vmatprep.subr.mxu0 0.0
    %1796 = vmatpush1.msra.mxu0 0.0
    %1797 = vmatprep.subr.mxu0 0.0
    %1798 = vmatpush1.msra.mxu0 0.0
    %1799 = vmatprep.subr.mxu0 0.0
    %1800 = vmatpush1.msra.mxu0 0.0
    %1801 = vmatprep.subr.mxu0 0.0
    %1802 = vmatpush1.msra.mxu0 0.0
    %1803 = vmatprep.subr.mxu0 0.0
    %1804 = vmatpush1.msra.mxu0 0.0
    %1805 = vmatprep.subr.mxu0 0.0
    %1806 = vmatpush1.msra.mxu0 0.0
    %1807 = vmatprep.subr.mxu0 0.0
    %1808 = vmatpush1.msra.mxu0 0.0
    %1809 = vmatprep.subr.mxu0 0.0
    %1810 = vmatpush1.msra.mxu0 0.0
    %1811 = vmatprep.subr.mxu0 0.0
    %1812 = vmatpush1.msra.mxu0 0.0
    %1813 = vmatprep.mubr.f32.mxu0 0.0
    %1814 = vmatmul.mubr.f32.gmra.mrb[0].mxu0 %v1707
    %v1815 = vpop.f32.mrb[0].mxu0
    %v1816 = vadd.f32 %v1747, %v1815
    %v1817 = vpop.f32.mrb[0].mxu0
    %1818 = vdwg.mxu0
    %v1819 = vadd.f32 %v1483, %v1816
    %s1820 = scalar_lea.vmem [#allocation5], 1024
    %v1821 = vld [vmem:[%s1820] sm:$0xf]
    %v1822 = vld [vmem:[%s1820 + $0x4] sm:$0xf]
    %v1823 = vld [vmem:[%s1820 + $0x8] sm:$0xf]
    %v1824 = vld [vmem:[%s1820 + $0xc] sm:$0xf]
    %v1825 = vld [vmem:[%s1820 + $0x10] sm:$0xf]
    %v1826 = vld [vmem:[%s1820 + $0x14] sm:$0xf]
    %v1827 = vld [vmem:[%s1820 + $0x18] sm:$0xf]
    %v1828 = vld [vmem:[%s1820 + $0x1c] sm:$0xf]
    %v1829 = vld [vmem:[%s1820 + $0x20] sm:$0xf]
    %v1830 = vld [vmem:[%s1820 + $0x24] sm:$0xf]
    %v1831 = vld [vmem:[%s1820 + $0x28] sm:$0xf]
    %v1832 = vld [vmem:[%s1820 + $0x2c] sm:$0xf]
    %v1833 = vld [vmem:[%s1820 + $0x30] sm:$0xf]
    %v1834 = vld [vmem:[%s1820 + $0x34] sm:$0xf]
    %v1835 = vld [vmem:[%s1820 + $0x38] sm:$0xf]
    %v1836 = vld [vmem:[%s1820 + $0x3c] sm:$0xf]
    %v1837 = vunpack.c.l.bf16 %v1821
    %v1838 = vunpack.c.l.bf16 %v1822
    %v1839 = vunpack.c.l.bf16 %v1823
    %v1840 = vunpack.c.l.bf16 %v1824
    %v1841 = vunpack.c.l.bf16 %v1825
    %v1842 = vunpack.c.l.bf16 %v1826
    %v1843 = vunpack.c.l.bf16 %v1827
    %v1844 = vunpack.c.l.bf16 %v1828
    %v1845 = vunpack.c.l.bf16 %v1829
    %v1846 = vunpack.c.l.bf16 %v1830
    %v1847 = vunpack.c.l.bf16 %v1831
    %v1848 = vunpack.c.l.bf16 %v1832
    %v1849 = vunpack.c.l.bf16 %v1833
    %v1850 = vunpack.c.l.bf16 %v1834
    %v1851 = vunpack.c.l.bf16 %v1835
    %v1852 = vunpack.c.l.bf16 %v1836
    %s1853 = scalar_lea.vmem [#allocation7], 16
    %v1854 = vld [vmem:[%s1853] sm:$0x1]
    %v1856 = vlaneseq
    %v1857 = vshrl.u32 %v1856, 7
    %v1858 = vsub.s32 0, %v1857
    %v1859 = vrot.slane %v1854, %v1858
    %1861 = vmatprep.subr.mxu0 0.0
    %1862 = vmatpush1.msra.mxu0 %v1837
    %1863 = vmatprep.subr.mxu0 0.0
    %1864 = vmatpush1.msra.mxu0 %v1838
    %1865 = vmatprep.subr.mxu0 0.0
    %1866 = vmatpush1.msra.mxu0 %v1839
    %1867 = vmatprep.subr.mxu0 0.0
    %1868 = vmatpush1.msra.mxu0 %v1840
    %1869 = vmatprep.subr.mxu0 0.0
    %1870 = vmatpush1.msra.mxu0 %v1841
    %1871 = vmatprep.subr.mxu0 0.0
    %1872 = vmatpush1.msra.mxu0 %v1842
    %1873 = vmatprep.subr.mxu0 0.0
    %1874 = vmatpush1.msra.mxu0 %v1843
    %1875 = vmatprep.subr.mxu0 0.0
    %1876 = vmatpush1.msra.mxu0 %v1844
    %1877 = vmatprep.subr.mxu0 0.0
    %1878 = vmatpush1.msra.mxu0 %v1845
    %1879 = vmatprep.subr.mxu0 0.0
    %1880 = vmatpush1.msra.mxu0 %v1846
    %1881 = vmatprep.subr.mxu0 0.0
    %1882 = vmatpush1.msra.mxu0 %v1847
    %1883 = vmatprep.subr.mxu0 0.0
    %1884 = vmatpush1.msra.mxu0 %v1848
    %1885 = vmatprep.subr.mxu0 0.0
    %1886 = vmatpush1.msra.mxu0 %v1849
    %1887 = vmatprep.subr.mxu0 0.0
    %1888 = vmatpush1.msra.mxu0 %v1850
    %1889 = vmatprep.subr.mxu0 0.0
    %1890 = vmatpush1.msra.mxu0 %v1851
    %1891 = vmatprep.subr.mxu0 0.0
    %1892 = vmatpush1.msra.mxu0 %v1852
    %1893 = vmatprep.subr.mxu0 0.0
    %1894 = vmatpush1.msra.mxu0 0.0
    %1895 = vmatprep.subr.mxu0 0.0
    %1896 = vmatpush1.msra.mxu0 0.0
    %1897 = vmatprep.subr.mxu0 0.0
    %1898 = vmatpush1.msra.mxu0 0.0
    %1899 = vmatprep.subr.mxu0 0.0
    %1900 = vmatpush1.msra.mxu0 0.0
    %1901 = vmatprep.subr.mxu0 0.0
    %1902 = vmatpush1.msra.mxu0 0.0
    %1903 = vmatprep.subr.mxu0 0.0
    %1904 = vmatpush1.msra.mxu0 0.0
    %1905 = vmatprep.subr.mxu0 0.0
    %1906 = vmatpush1.msra.mxu0 0.0
    %1907 = vmatprep.subr.mxu0 0.0
    %1908 = vmatpush1.msra.mxu0 0.0
    %1909 = vmatprep.subr.mxu0 0.0
    %1910 = vmatpush1.msra.mxu0 0.0
    %1911 = vmatprep.subr.mxu0 0.0
    %1912 = vmatpush1.msra.mxu0 0.0
    %1913 = vmatprep.subr.mxu0 0.0
    %1914 = vmatpush1.msra.mxu0 0.0
    %1915 = vmatprep.subr.mxu0 0.0
    %1916 = vmatpush1.msra.mxu0 0.0
    %1917 = vmatprep.subr.mxu0 0.0
    %1918 = vmatpush1.msra.mxu0 0.0
    %1919 = vmatprep.subr.mxu0 0.0
    %1920 = vmatpush1.msra.mxu0 0.0
    %1921 = vmatprep.subr.mxu0 0.0
    %1922 = vmatpush1.msra.mxu0 0.0
    %1923 = vmatprep.subr.mxu0 0.0
    %1924 = vmatpush1.msra.mxu0 0.0
    %1925 = vmatprep.mubr.f32.mxu0 0.0
    %1926 = vmatmul.mubr.f32.gmra.mrb[0].mxu0 %v1819
    %v1927 = vpop.f32.mrb[0].mxu0
    %v1928 = vadd.f32 %v1859, %v1927
    %v1929 = vpop.f32.mrb[0].mxu0
    %1930 = vdwg.mxu0
    %1931 = vst [vmem:[#allocation8] sm:$0xff] %v1928
    // Predicated region
    $region26: #{mlp_forward.1} parent=1 // pred_check
      _
    $region27: #{mlp_forward.1} parent=1 // pred_check_branch
      %1933 = sbr.rel (0) target = $region29
    $region28: #{mlp_forward.1} parent=1 // pred_region
      %s1935 = ssub.s32 128, 128
      %1936 = vsyncadd [#allocation4], %s1935
      %s1938 = sshll.u32 [#allocation8], 4
      %s1939 = int_to_ptr.vmem [resolvable:$true] %s1938
      %1941 = dma.vmem_to_hbm [thread:$0]  %s1939, 128, %s3, [#allocation4]
    $region29: #{mlp_forward.1} parent=1 // pred_fallthru
      _
    // Predicated region
    $region30: #{mlp_forward.1} parent=1 // pred_check
      _
    $region31: #{mlp_forward.1} parent=1 // pred_check_branch
      %1943 = sbr.rel (0) target = $region33
    $region32: #{mlp_forward.1} parent=1 // pred_region
      %1944 = dma.done [#allocation4], 128
    $region33: #{mlp_forward.1} parent=1 // pred_fallthru
      _
    %1945 = vsyncpa [#allocation3], 1
    %1946 = vsyncpa [#allocation6], 1
    %1947 = vsyncpa [#allocation4], 1

</llo_original>
